<compile_context>
chip_gen: v5e
topology: v5e:2x2
jax: 0.10.0
libtpu: 0.0.40
codegen_flags: <defaults>
</compile_context>

<pallas_src>
import jax
import jax.numpy as jnp
from jax.experimental import pallas as pl
from jax.experimental.pallas import tpu as pltpu

STATE_SIZE = 29
ACTION_SIZE = 3
HIDDEN1_UNITS = 300
HIDDEN2_UNITS = 600

# Lane/sublane-friendly padded sizes (all padding is zeros => math unchanged).
S_PAD = 32
A_PAD = 8
H1_PAD = 384
H2_PAD = 640

TB_MAX = 256  # max batch-tile rows per grid step


def _round_up(x, m):
    return ((x + m - 1) // m) * m


def critic_kernel(s_ref, a_ref,
                  w1_ref, b1_ref, wa_ref, ba_ref,
                  wh1_ref, bh1_ref, wh3_ref, bh3_ref,
                  wv_ref, bv_ref, out_ref):
    bf16, f32 = jnp.bfloat16, jnp.float32
    # state branch: fc + relu
    x1 = jnp.dot(s_ref[...].astype(bf16), w1_ref[...], preferred_element_type=f32)
    x1 = jnp.maximum(x1 + b1_ref[...], 0.0)
    # action branch: fc (no activation)
    a1 = jnp.dot(a_ref[...].astype(bf16), wa_ref[...], preferred_element_type=f32)
    a1 = a1 + ba_ref[...]
    # hidden1 -> hidden2 + residual add of the action branch
    h1 = jnp.dot(x1.astype(bf16), wh1_ref[...], preferred_element_type=f32)
    h2 = h1 + bh1_ref[...] + a1
    # hidden2 -> hidden2 + relu
    h3 = jnp.dot(h2.astype(bf16), wh3_ref[...], preferred_element_type=f32)
    h3 = jnp.maximum(h3 + bh3_ref[...], 0.0)
    # value head
    out = jnp.dot(h3.astype(bf16), wv_ref[...], preferred_element_type=f32)
    out_ref[...] = (out + bv_ref[...]).astype(out_ref.dtype)


def critic_forward(s, a, prepared_params):
    """s: (B, 29) f32, a: (B, 3) f32, prepared_params: output of prepare_params."""
    (w1, b1, wa, ba, wh1, bh1, wh3, bh3, wv, bv) = prepared_params
    B = s.shape[0]
    TB = min(TB_MAX, _round_up(B, 8))
    B_pad = _round_up(B, TB)

    # Zero-pad inputs to the padded layout (feature pads are all zero).
    s_p = jnp.zeros((B_pad, S_PAD), jnp.float32).at[:B, :STATE_SIZE].set(s)
    a_p = jnp.zeros((B_pad, A_PAD), jnp.float32).at[:B, :ACTION_SIZE].set(a)

    grid = (B_pad // TB,)
    row_map = lambda i: (i, 0)      # batch-tiled activations / output
    const_map = lambda i: (0, 0)    # weights/biases resident across grid steps
    full = lambda arr: pl.BlockSpec(arr.shape, const_map)

    weight_bytes = sum(int(w.size) * w.dtype.itemsize
                       for w in (w1, b1, wa, ba, wh1, bh1, wh3, bh3, wv, bv))
    flops = 2 * B_pad * (S_PAD * H1_PAD + A_PAD * H2_PAD + H1_PAD * H2_PAD
                         + H2_PAD * H2_PAD + H2_PAD * ACTION_SIZE)
    cost = pl.CostEstimate(
        flops=flops,
        transcendentals=0,
        bytes_accessed=weight_bytes + B_pad * (S_PAD + A_PAD + ACTION_SIZE) * 4,
    )

    out = pl.pallas_call(
        critic_kernel,
        out_shape=jax.ShapeDtypeStruct((B_pad, ACTION_SIZE), jnp.float32),
        grid=grid,
        in_specs=[
            pl.BlockSpec((TB, S_PAD), row_map),
            pl.BlockSpec((TB, A_PAD), row_map),
            full(w1), full(b1), full(wa), full(ba),
            full(wh1), full(bh1), full(wh3), full(bh3),
            full(wv), full(bv),
        ],
        out_specs=pl.BlockSpec((TB, ACTION_SIZE), row_map),
        compiler_params=pltpu.CompilerParams(
            dimension_semantics=("parallel",)),
        cost_estimate=cost,
    )(s_p, a_p, w1, b1, wa, ba, wh1, bh1, wh3, bh3, wv, bv)
    return out[:B]


def init_params(key):
    """nn.Linear default init: weight & bias ~ U(-1/sqrt(fan_in), 1/sqrt(fan_in)).
    Weights are stored as (in, out) so the kernel computes y = x @ W + b."""
    keys = jax.random.split(key, 10)

    def linear(kw, kb, fan_in, fan_out):
        bound = float(fan_in) ** -0.5
        w = jax.random.uniform(kw, (fan_in, fan_out), jnp.float32, -bound, bound)
        b = jax.random.uniform(kb, (fan_out,), jnp.float32, -bound, bound)
        return w, b

    w1, b1 = linear(keys[0], keys[1], STATE_SIZE, HIDDEN1_UNITS)    # self.w1
    wa, ba = linear(keys[2], keys[3], ACTION_SIZE, HIDDEN2_UNITS)   # self.a1
    wh1, bh1 = linear(keys[4], keys[5], HIDDEN1_UNITS, HIDDEN2_UNITS)  # self.h1
    wh3, bh3 = linear(keys[6], keys[7], HIDDEN2_UNITS, HIDDEN2_UNITS)  # self.h3
    wv, bv = linear(keys[8], keys[9], HIDDEN2_UNITS, ACTION_SIZE)   # self.V
    return (w1, b1, wa, ba, wh1, bh1, wh3, bh3, wv, bv)


def prepare_params(raw):
    """Pad to lane-friendly shapes (zeros) and cast weights to bf16, once."""
    (w1, b1, wa, ba, wh1, bh1, wh3, bh3, wv, bv) = raw

    def pad_w(w, rows, cols):
        out = jnp.zeros((rows, cols), jnp.float32).at[:w.shape[0], :w.shape[1]].set(w)
        return out.astype(jnp.bfloat16)

    def pad_b(b, cols):
        return jnp.zeros((1, cols), jnp.float32).at[0, :b.shape[0]].set(b)

    return (
        pad_w(w1, S_PAD, H1_PAD), pad_b(b1, H1_PAD),
        pad_w(wa, A_PAD, H2_PAD), pad_b(ba, H2_PAD),
        pad_w(wh1, H1_PAD, H2_PAD), pad_b(bh1, H2_PAD),
        pad_w(wh3, H2_PAD, H2_PAD), pad_b(bh3, H2_PAD),
        pad_w(wv, H2_PAD, ACTION_SIZE), pad_b(bv, ACTION_SIZE),
    )


def _reference(s, a, prepared):
    """Pure-JAX mirror of the kernel math (same bf16 casts, f32 accumulation)."""
    (w1, b1, wa, ba, wh1, bh1, wh3, bh3, wv, bv) = prepared
    bf16, f32 = jnp.bfloat16, jnp.float32
    B = s.shape[0]
    s_p = jnp.zeros((B, S_PAD), f32).at[:, :STATE_SIZE].set(s)
    a_p = jnp.zeros((B, A_PAD), f32).at[:, :ACTION_SIZE].set(a)
    x1 = jnp.maximum(jnp.dot(s_p.astype(bf16), w1, preferred_element_type=f32) + b1, 0.0)
    a1 = jnp.dot(a_p.astype(bf16), wa, preferred_element_type=f32) + ba
    h2 = jnp.dot(x1.astype(bf16), wh1, preferred_element_type=f32) + bh1 + a1
    h3 = jnp.maximum(jnp.dot(h2.astype(bf16), wh3, preferred_element_type=f32) + bh3, 0.0)
    return jnp.dot(h3.astype(bf16), wv, preferred_element_type=f32) + bv


if __name__ == "__main__":
    key = jax.random.PRNGKey(0)
    kp, ks, ka = jax.random.split(key, 3)

    raw_params = init_params(kp)
    params = prepare_params(raw_params)

    B = 2
    s = jax.random.normal(ks, (B, STATE_SIZE), jnp.float32)
    a = jax.random.uniform(ka, (B, ACTION_SIZE), jnp.float32, -1.0, 1.0)

    out = critic_forward(s, a, params)
    out = jax.block_until_ready(out)

    ref = _reference(s, a, params)
    assert out.shape == (B, ACTION_SIZE)
    assert jnp.allclose(out, ref, atol=1e-3, rtol=1e-3), (
        f"max abs diff {jnp.max(jnp.abs(out - ref))}")

    print("KERNEL_OK")
</pallas_src>

<mosaic_0001>
module attributes {stable_mosaic.version = 11 : i64} {
  func.func @critic_kernel(%arg0: i32, %arg1: memref<8x32xf32, #tpu.memory_space<vmem>>, %arg2: memref<8x8xf32, #tpu.memory_space<vmem>>, %arg3: memref<32x384xbf16, #tpu.memory_space<vmem>>, %arg4: memref<1x384xf32, #tpu.memory_space<vmem>>, %arg5: memref<8x640xbf16, #tpu.memory_space<vmem>>, %arg6: memref<1x640xf32, #tpu.memory_space<vmem>>, %arg7: memref<384x640xbf16, #tpu.memory_space<vmem>>, %arg8: memref<1x640xf32, #tpu.memory_space<vmem>>, %arg9: memref<640x640xbf16, #tpu.memory_space<vmem>>, %arg10: memref<1x640xf32, #tpu.memory_space<vmem>>, %arg11: memref<640x3xbf16, #tpu.memory_space<vmem>>, %arg12: memref<1x3xf32, #tpu.memory_space<vmem>>, %arg13: memref<8x3xf32, #tpu.memory_space<vmem>>) attributes {dimension_semantics = [#tpu.dimension_semantics<parallel>], iteration_bounds = array<i64: 1>, scalar_prefetch = 0 : i64, scratch_operands = 0 : i64, tpu.core_type = #tpu.core_type<tc>, window_params = [{transform_indices = @transform_0, window_bounds = array<i64: 8, 32>}, {transform_indices = @transform_1, window_bounds = array<i64: 8, 8>}, {pipeline_mode = #tpu.pipeline_mode<synchronous>, transform_indices = @transform_2, window_bounds = array<i64: 32, 384>}, {pipeline_mode = #tpu.pipeline_mode<synchronous>, transform_indices = @transform_3, window_bounds = array<i64: 1, 384>}, {pipeline_mode = #tpu.pipeline_mode<synchronous>, transform_indices = @transform_4, window_bounds = array<i64: 8, 640>}, {pipeline_mode = #tpu.pipeline_mode<synchronous>, transform_indices = @transform_5, window_bounds = array<i64: 1, 640>}, {pipeline_mode = #tpu.pipeline_mode<synchronous>, transform_indices = @transform_6, window_bounds = array<i64: 384, 640>}, {pipeline_mode = #tpu.pipeline_mode<synchronous>, transform_indices = @transform_7, window_bounds = array<i64: 1, 640>}, {pipeline_mode = #tpu.pipeline_mode<synchronous>, transform_indices = @transform_8, window_bounds = array<i64: 640, 640>}, {pipeline_mode = #tpu.pipeline_mode<synchronous>, transform_indices = @transform_9, window_bounds = array<i64: 1, 640>}, {pipeline_mode = #tpu.pipeline_mode<synchronous>, transform_indices = @transform_10, window_bounds = array<i64: 640, 3>}, {pipeline_mode = #tpu.pipeline_mode<synchronous>, transform_indices = @transform_11, window_bounds = array<i64: 1, 3>}, {transform_indices = @transform_12, window_bounds = array<i64: 8, 3>}]} {
    %c0 = arith.constant 0 : index
    %c0_0 = arith.constant 0 : index
    %0 = vector.load %arg1[%c0, %c0_0] : memref<8x32xf32, #tpu.memory_space<vmem>>, vector<8x32xf32>
    %1 = arith.truncf %0 : vector<8x32xf32> to vector<8x32xbf16>
    %c0_1 = arith.constant 0 : index
    %c0_2 = arith.constant 0 : index
    %2 = vector.load %arg3[%c0_1, %c0_2] : memref<32x384xbf16, #tpu.memory_space<vmem>>, vector<32x384xbf16>
    %cst = arith.constant dense<0.000000e+00> : vector<8x384xf32>
    %3 = tpu.matmul %1, %2, %cst {dimension_numbers = #tpu.dot_dimension_numbers<[1], [0], [0], [1], [0, 0, 1, 1], [], []>} : vector<8x32xbf16>, vector<32x384xbf16>, vector<8x384xf32> -> vector<8x384xf32>
    %c0_3 = arith.constant 0 : index
    %c0_4 = arith.constant 0 : index
    %4 = vector.load %arg4[%c0_3, %c0_4] : memref<1x384xf32, #tpu.memory_space<vmem>>, vector<1x384xf32>
    %5 = vector.broadcast %4 : vector<1x384xf32> to vector<8x384xf32>
    %6 = arith.addf %3, %5 : vector<8x384xf32>
    %cst_5 = arith.constant 0.000000e+00 : f32
    %7 = vector.broadcast %cst_5 : f32 to vector<8x384xf32>
    %8 = arith.maximumf %6, %7 : vector<8x384xf32>
    %c0_6 = arith.constant 0 : index
    %c0_7 = arith.constant 0 : index
    %9 = vector.load %arg2[%c0_6, %c0_7] : memref<8x8xf32, #tpu.memory_space<vmem>>, vector<8x8xf32>
    %10 = arith.truncf %9 : vector<8x8xf32> to vector<8x8xbf16>
    %c0_8 = arith.constant 0 : index
    %c0_9 = arith.constant 0 : index
    %11 = vector.load %arg5[%c0_8, %c0_9] : memref<8x640xbf16, #tpu.memory_space<vmem>>, vector<8x640xbf16>
    %cst_10 = arith.constant dense<0.000000e+00> : vector<8x640xf32>
    %12 = tpu.matmul %10, %11, %cst_10 {dimension_numbers = #tpu.dot_dimension_numbers<[1], [0], [0], [1], [0, 0, 1, 1], [], []>} : vector<8x8xbf16>, vector<8x640xbf16>, vector<8x640xf32> -> vector<8x640xf32>
    %c0_11 = arith.constant 0 : index
    %c0_12 = arith.constant 0 : index
    %13 = vector.load %arg6[%c0_11, %c0_12] : memref<1x640xf32, #tpu.memory_space<vmem>>, vector<1x640xf32>
    %14 = vector.broadcast %13 : vector<1x640xf32> to vector<8x640xf32>
    %15 = arith.addf %12, %14 : vector<8x640xf32>
    %16 = arith.truncf %8 : vector<8x384xf32> to vector<8x384xbf16>
    %c0_13 = arith.constant 0 : index
    %c0_14 = arith.constant 0 : index
    %17 = vector.load %arg7[%c0_13, %c0_14] : memref<384x640xbf16, #tpu.memory_space<vmem>>, vector<384x640xbf16>
    %cst_15 = arith.constant dense<0.000000e+00> : vector<8x640xf32>
    %18 = tpu.matmul %16, %17, %cst_15 {dimension_numbers = #tpu.dot_dimension_numbers<[1], [0], [0], [1], [0, 0, 1, 1], [], []>} : vector<8x384xbf16>, vector<384x640xbf16>, vector<8x640xf32> -> vector<8x640xf32>
    %c0_16 = arith.constant 0 : index
    %c0_17 = arith.constant 0 : index
    %19 = vector.load %arg8[%c0_16, %c0_17] : memref<1x640xf32, #tpu.memory_space<vmem>>, vector<1x640xf32>
    %20 = vector.broadcast %19 : vector<1x640xf32> to vector<8x640xf32>
    %21 = arith.addf %18, %20 : vector<8x640xf32>
    %22 = arith.addf %21, %15 : vector<8x640xf32>
    %23 = arith.truncf %22 : vector<8x640xf32> to vector<8x640xbf16>
    %c0_18 = arith.constant 0 : index
    %c0_19 = arith.constant 0 : index
    %24 = vector.load %arg9[%c0_18, %c0_19] : memref<640x640xbf16, #tpu.memory_space<vmem>>, vector<640x640xbf16>
    %cst_20 = arith.constant dense<0.000000e+00> : vector<8x640xf32>
    %25 = tpu.matmul %23, %24, %cst_20 {dimension_numbers = #tpu.dot_dimension_numbers<[1], [0], [0], [1], [0, 0, 1, 1], [], []>} : vector<8x640xbf16>, vector<640x640xbf16>, vector<8x640xf32> -> vector<8x640xf32>
    %c0_21 = arith.constant 0 : index
    %c0_22 = arith.constant 0 : index
    %26 = vector.load %arg10[%c0_21, %c0_22] : memref<1x640xf32, #tpu.memory_space<vmem>>, vector<1x640xf32>
    %27 = vector.broadcast %26 : vector<1x640xf32> to vector<8x640xf32>
    %28 = arith.addf %25, %27 : vector<8x640xf32>
    %cst_23 = arith.constant 0.000000e+00 : f32
    %29 = vector.broadcast %cst_23 : f32 to vector<8x640xf32>
    %30 = arith.maximumf %28, %29 : vector<8x640xf32>
    %31 = arith.truncf %30 : vector<8x640xf32> to vector<8x640xbf16>
    %c0_24 = arith.constant 0 : index
    %c0_25 = arith.constant 0 : index
    %32 = vector.load %arg11[%c0_24, %c0_25] : memref<640x3xbf16, #tpu.memory_space<vmem>>, vector<640x3xbf16>
    %cst_26 = arith.constant dense<0.000000e+00> : vector<8x3xf32>
    %33 = tpu.matmul %31, %32, %cst_26 {dimension_numbers = #tpu.dot_dimension_numbers<[1], [0], [0], [1], [0, 0, 1, 1], [], []>} : vector<8x640xbf16>, vector<640x3xbf16>, vector<8x3xf32> -> vector<8x3xf32>
    %c0_27 = arith.constant 0 : index
    %c0_28 = arith.constant 0 : index
    %34 = vector.load %arg12[%c0_27, %c0_28] : memref<1x3xf32, #tpu.memory_space<vmem>>, vector<1x3xf32>
    %35 = vector.broadcast %34 : vector<1x3xf32> to vector<8x3xf32>
    %36 = arith.addf %33, %35 : vector<8x3xf32>
    %c0_29 = arith.constant 0 : index
    %c0_30 = arith.constant 0 : index
    %37 = vector.load %arg13[%c0_29, %c0_30] : memref<8x3xf32, #tpu.memory_space<vmem>>, vector<8x3xf32>
    tpu.vector_store %arg13[%c0_29, %c0_30], %36 {strides = array<i32>} : memref<8x3xf32, #tpu.memory_space<vmem>>, vector<8x3xf32>,
    return
  }
  func.func @transform_0(%arg0: i32) -> (i32, i32) {
    %c0_i32 = arith.constant 0 : i32
    %c0_i32_0 = arith.constant 0 : i32
    return %arg0, %c0_i32 : i32, i32
  }
  func.func @transform_1(%arg0: i32) -> (i32, i32) {
    %c0_i32 = arith.constant 0 : i32
    %c0_i32_0 = arith.constant 0 : i32
    return %arg0, %c0_i32 : i32, i32
  }
  func.func @transform_2(%arg0: i32) -> (i32, i32) {
    %c0_i32 = arith.constant 0 : i32
    %c0_i32_0 = arith.constant 0 : i32
    %c0_i32_1 = arith.constant 0 : i32
    return %c0_i32, %c0_i32_0 : i32, i32
  }
  func.func @transform_3(%arg0: i32) -> (i32, i32) {
    %c0_i32 = arith.constant 0 : i32
    %c0_i32_0 = arith.constant 0 : i32
    %c0_i32_1 = arith.constant 0 : i32
    return %c0_i32, %c0_i32_0 : i32, i32
  }
  func.func @transform_4(%arg0: i32) -> (i32, i32) {
    %c0_i32 = arith.constant 0 : i32
    %c0_i32_0 = arith.constant 0 : i32
    %c0_i32_1 = arith.constant 0 : i32
    return %c0_i32, %c0_i32_0 : i32, i32
  }
  func.func @transform_5(%arg0: i32) -> (i32, i32) {
    %c0_i32 = arith.constant 0 : i32
    %c0_i32_0 = arith.constant 0 : i32
    %c0_i32_1 = arith.constant 0 : i32
    return %c0_i32, %c0_i32_0 : i32, i32
  }
  func.func @transform_6(%arg0: i32) -> (i32, i32) {
    %c0_i32 = arith.constant 0 : i32
    %c0_i32_0 = arith.constant 0 : i32
    %c0_i32_1 = arith.constant 0 : i32
    return %c0_i32, %c0_i32_0 : i32, i32
  }
  func.func @transform_7(%arg0: i32) -> (i32, i32) {
    %c0_i32 = arith.constant 0 : i32
    %c0_i32_0 = arith.constant 0 : i32
    %c0_i32_1 = arith.constant 0 : i32
    return %c0_i32, %c0_i32_0 : i32, i32
  }
  func.func @transform_8(%arg0: i32) -> (i32, i32) {
    %c0_i32 = arith.constant 0 : i32
    %c0_i32_0 = arith.constant 0 : i32
    %c0_i32_1 = arith.constant 0 : i32
    return %c0_i32, %c0_i32_0 : i32, i32
  }
  func.func @transform_9(%arg0: i32) -> (i32, i32) {
    %c0_i32 = arith.constant 0 : i32
    %c0_i32_0 = arith.constant 0 : i32
    %c0_i32_1 = arith.constant 0 : i32
    return %c0_i32, %c0_i32_0 : i32, i32
  }
  func.func @transform_10(%arg0: i32) -> (i32, i32) {
    %c0_i32 = arith.constant 0 : i32
    %c0_i32_0 = arith.constant 0 : i32
    %c0_i32_1 = arith.constant 0 : i32
    return %c0_i32, %c0_i32_0 : i32, i32
  }
  func.func @transform_11(%arg0: i32) -> (i32, i32) {
    %c0_i32 = arith.constant 0 : i32
    %c0_i32_0 = arith.constant 0 : i32
    %c0_i32_1 = arith.constant 0 : i32
    return %c0_i32, %c0_i32_0 : i32, i32
  }
  func.func @transform_12(%arg0: i32) -> (i32, i32) {
    %c0_i32 = arith.constant 0 : i32
    %c0_i32_0 = arith.constant 0 : i32
    return %arg0, %c0_i32 : i32, i32
  }
}

</mosaic_0001>

<llo_original>
// kernel: tpu_custom_call.1
$region0: #{tpu_custom_call.1}
  #allocation0 [shape = 'u32[]', space=smem, size = 0x4, offset = 0x4, fixed_abs, tag = 'smem constant byte address 0x4 - core index']
  #allocation1 [shape = 'u32[72,128]{1,0:T(1,128)}', space=vmem, size = 0x9000, scoped, tag = 'internal scratch']
  %s0 = inlined_call_operand.vmem [shape: f32[8,32], index: 0, kind: input, shape index: {}]
  %s1 = inlined_call_operand.vmem [shape: f32[8,8], index: 1, kind: input, shape index: {}]
  %s2 = inlined_call_operand.vmem [shape: bf16[32,384], index: 2, kind: input, shape index: {}]
  %s3 = inlined_call_operand.vmem [shape: f32[1,384], index: 3, kind: input, shape index: {}]
  %s4 = inlined_call_operand.vmem [shape: bf16[8,640], index: 4, kind: input, shape index: {}]
  %s5 = inlined_call_operand.vmem [shape: f32[1,640], index: 5, kind: input, shape index: {}]
  %s6 = inlined_call_operand.hbm [shape: bf16[384,640], index: 6, kind: input, shape index: {}]
  %s7 = inlined_call_operand.vmem [shape: f32[1,640], index: 7, kind: input, shape index: {}]
  %s8 = inlined_call_operand.hbm [shape: bf16[640,640], index: 8, kind: input, shape index: {}]
  %s9 = inlined_call_operand.vmem [shape: f32[1,640], index: 9, kind: input, shape index: {}]
  %s10 = inlined_call_operand.vmem [shape: bf16[640,3], index: 10, kind: input, shape index: {}]
  %s11 = inlined_call_operand.vmem [shape: f32[1,3], index: 11, kind: input, shape index: {}]
  %s12 = inlined_call_operand.vmem [shape: f32[8,3], index: 12, kind: output, shape index: {}]
  %s13 = sld [smem:[#allocation0]]
  $region66: #{tpu_custom_call.1} parent=0
    _
  %s15 = ssub.s32 1, %s13
  %s16 = scalar_select 0, %s15, %s13
  $region1: #{tpu_custom_call.1} parent=0
    #allocation2 [shape = 'u8[491520]{0}', space=vmem, size = 0x78000, scoped, tag = 'input window, operand 6, single buffered']
    #allocation3 [shape = 's32[1]{0}', space=sflag, size = 0x4, scoped, tag = 'scoped memory for tpu_custom_call.1']
    #allocation4 [shape = 'u8[819200]{0}', space=vmem, size = 0xc8000, scoped, tag = 'input window, operand 8, single buffered']
    #allocation5 [shape = 's32[1]{0}', space=sflag, size = 0x4, scoped, tag = 'scoped memory for tpu_custom_call.1']
    %17 = vsyncpa [#allocation3], 0
    %18 = vsyncpa [#allocation5], 0
    // Predicated region
    $region2: #{tpu_custom_call.1} parent=1 // pred_check
      _
    $region3: #{tpu_custom_call.1} parent=1 // pred_check_branch
      %20 = sbr.rel (0) target = $region5
    $region4: #{tpu_custom_call.1} parent=1 // pred_region
      _
    $region5: #{tpu_custom_call.1} parent=1 // pred_fallthru
      _
    // Predicated region
    $region6: #{tpu_custom_call.1} parent=1 // pred_check
      _
    $region7: #{tpu_custom_call.1} parent=1 // pred_check_branch
      %22 = sbr.rel (0) target = $region9
    $region8: #{tpu_custom_call.1} parent=1 // pred_region
      _
    $region9: #{tpu_custom_call.1} parent=1 // pred_fallthru
      _
    // Predicated region
    $region10: #{tpu_custom_call.1} parent=1 // pred_check
      _
    $region11: #{tpu_custom_call.1} parent=1 // pred_check_branch
      %24 = sbr.rel (0) target = $region13
    $region12: #{tpu_custom_call.1} parent=1 // pred_region
      _
    $region13: #{tpu_custom_call.1} parent=1 // pred_fallthru
      _
    // Predicated region
    $region14: #{tpu_custom_call.1} parent=1 // pred_check
      _
    $region15: #{tpu_custom_call.1} parent=1 // pred_check_branch
      %26 = sbr.rel (0) target = $region17
    $region16: #{tpu_custom_call.1} parent=1 // pred_region
      _
    $region17: #{tpu_custom_call.1} parent=1 // pred_fallthru
      _
    // Predicated region
    $region18: #{tpu_custom_call.1} parent=1 // pred_check
      _
    $region19: #{tpu_custom_call.1} parent=1 // pred_check_branch
      %28 = sbr.rel (0) target = $region21
    $region20: #{tpu_custom_call.1} parent=1 // pred_region
      _
    $region21: #{tpu_custom_call.1} parent=1 // pred_fallthru
      _
    // Predicated region
    $region22: #{tpu_custom_call.1} parent=1 // pred_check
      _
    $region23: #{tpu_custom_call.1} parent=1 // pred_check_branch
      %30 = sbr.rel (0) target = $region25
    $region24: #{tpu_custom_call.1} parent=1 // pred_region
      _
    $region25: #{tpu_custom_call.1} parent=1 // pred_fallthru
      _
    // Predicated region
    $region26: #{tpu_custom_call.1} parent=1 // pred_check
      _
    $region27: #{tpu_custom_call.1} parent=1 // pred_check_branch
      %32 = sbr.rel (0) target = $region29
    $region28: #{tpu_custom_call.1} parent=1 // pred_region
      %34 = vsyncadd [#allocation3], 0
      %s35 = sshll.u32 %s6, 4
      %s36 = int_to_ptr.hbm [resolvable:$true] %s35
      %s37 = sshll.u32 [#allocation2], 4
      %s38 = int_to_ptr.vmem [resolvable:$true] %s37
      %43 = dma.hbm_to_vmem [thread:$0]  %s36, 15360, %s38, [#allocation3], 320, 320, 20
    $region29: #{tpu_custom_call.1} parent=1 // pred_fallthru
      _
    // Predicated region
    $region30: #{tpu_custom_call.1} parent=1 // pred_check
      _
    $region31: #{tpu_custom_call.1} parent=1 // pred_check_branch
      %45 = sbr.rel (0) target = $region33
    $region32: #{tpu_custom_call.1} parent=1 // pred_region
      _
    $region33: #{tpu_custom_call.1} parent=1 // pred_fallthru
      _
    // Predicated region
    $region34: #{tpu_custom_call.1} parent=1 // pred_check
      _
    $region35: #{tpu_custom_call.1} parent=1 // pred_check_branch
      %47 = sbr.rel (0) target = $region37
    $region36: #{tpu_custom_call.1} parent=1 // pred_region
      %49 = vsyncadd [#allocation5], 0
      %s50 = sshll.u32 %s8, 4
      %s51 = int_to_ptr.hbm [resolvable:$true] %s50
      %s52 = sshll.u32 [#allocation4], 4
      %s53 = int_to_ptr.vmem [resolvable:$true] %s52
      %58 = dma.hbm_to_vmem [thread:$0]  %s51, 25600, %s53, [#allocation5], 320, 320, 20
    $region37: #{tpu_custom_call.1} parent=1 // pred_fallthru
      _
    // Predicated region
    $region38: #{tpu_custom_call.1} parent=1 // pred_check
      _
    $region39: #{tpu_custom_call.1} parent=1 // pred_check_branch
      %60 = sbr.rel (0) target = $region41
    $region40: #{tpu_custom_call.1} parent=1 // pred_region
      _
    $region41: #{tpu_custom_call.1} parent=1 // pred_fallthru
      _
    // Predicated region
    $region42: #{tpu_custom_call.1} parent=1 // pred_check
      _
    $region43: #{tpu_custom_call.1} parent=1 // pred_check_branch
      %62 = sbr.rel (0) target = $region45
    $region44: #{tpu_custom_call.1} parent=1 // pred_region
      _
    $region45: #{tpu_custom_call.1} parent=1 // pred_fallthru
      _
    // Predicated region
    $region46: #{tpu_custom_call.1} parent=1 // pred_check
      _
    $region47: #{tpu_custom_call.1} parent=1 // pred_check_branch
      %64 = sbr.rel (0) target = $region49
    $region48: #{tpu_custom_call.1} parent=1 // pred_region
      _
    $region49: #{tpu_custom_call.1} parent=1 // pred_fallthru
      _
    // Predicated region
    $region50: #{tpu_custom_call.1} parent=1 // pred_check
      _
    $region51: #{tpu_custom_call.1} parent=1 // pred_check_branch
      %66 = sbr.rel (0) target = $region53
    $region52: #{tpu_custom_call.1} parent=1 // pred_region
      %68 = dma.done [#allocation3], 15360
    $region53: #{tpu_custom_call.1} parent=1 // pred_fallthru
      _
    // Predicated region
    $region54: #{tpu_custom_call.1} parent=1 // pred_check
      _
    $region55: #{tpu_custom_call.1} parent=1 // pred_check_branch
      %70 = sbr.rel (0) target = $region57
    $region56: #{tpu_custom_call.1} parent=1 // pred_region
      %72 = dma.done [#allocation5], 25600
    $region57: #{tpu_custom_call.1} parent=1 // pred_fallthru
      _
    %v74 = vld [vmem:[%s0] sm:$0xff]
    %v75 = vpack.c.bf16 %v74, %v74
    %v76 = vld [vmem:[%s2] sm:$0xff]
    %v77 = vld [vmem:[%s2 + $0x8] sm:$0xf]
    %v78 = vld [vmem:[%s2 + $0xc] sm:$0xff]
    %v79 = vld [vmem:[%s2 + $0x14] sm:$0xf]
    %v80 = vld [vmem:[%s2 + $0x18] sm:$0xff]
    %v81 = vld [vmem:[%s2 + $0x20] sm:$0xf]
    %v82 = vld [vmem:[%s2 + $0x24] sm:$0xff]
    %v83 = vld [vmem:[%s2 + $0x2c] sm:$0xf]
    %v84 = vld [vmem:[%s3] sm:$0x7]
    %v86 = vperm.slane %v84, 0
    %v87 = vperm.slane %v84, 1
    %v88 = vperm.slane %v84, 2
    %v100 = vunpack.c.l.b16 %v76
    %v101 = vunpack.c.h.b16 %v76
    %v102 = vunpack.c.l.b16 %v77
    %v103 = vunpack.c.l.b16 %v78
    %v104 = vunpack.c.h.b16 %v78
    %v105 = vunpack.c.l.b16 %v79
    %v106 = vunpack.c.l.b16 %v80
    %v107 = vunpack.c.h.b16 %v80
    %v108 = vunpack.c.l.b16 %v81
    %v109 = vunpack.c.l.b16 %v82
    %v110 = vunpack.c.h.b16 %v82
    %v111 = vunpack.c.l.b16 %v83
    %v112 = vpack.c.b16 %v103, %v100
    %v113 = vpack.c.b16 %v104, %v101
    %v114 = vpack.c.b16 %v105, %v102
    %v115 = vpack.c.b16 %v109, %v106
    %v116 = vpack.c.b16 %v110, %v107
    %v117 = vpack.c.b16 %v111, %v108
    %vm124 = vcmask 261120
    %v126 = vsel %vm124, %v75, 0
    %128 = vmatpush.bf16.msra.mxu0 0
    %129 = vmatpush.bf16.msra.mxu0 0
    %130 = vmatpush.bf16.msra.mxu0 0
    %131 = vmatpush.bf16.msra.mxu0 0
    %132 = vmatpush.bf16.msra.mxu0 0
    %133 = vmatpush.bf16.msra.mxu0 0
    %134 = vmatpush.bf16.msra.mxu0 %v115
    %135 = vmatpush.bf16.msra.mxu0 %v112
    %136 = vmatmul.bf16.gmra.mxu0 %v126
    %v137 = vpop.f32.mrf.mxu0
    %v138 = vadd.f32 %v86, %v137
    %v139 = vpop.f32.mrf.mxu0
    %140 = vdwg.mxu0
    %141 = vmatpush.bf16.msra.mxu0 0
    %142 = vmatpush.bf16.msra.mxu0 0
    %143 = vmatpush.bf16.msra.mxu0 0
    %144 = vmatpush.bf16.msra.mxu0 0
    %145 = vmatpush.bf16.msra.mxu0 0
    %146 = vmatpush.bf16.msra.mxu0 0
    %147 = vmatpush.bf16.msra.mxu0 %v116
    %148 = vmatpush.bf16.msra.mxu0 %v113
    %149 = vmatmul.bf16.gmra.mxu0 %v126
    %v150 = vpop.f32.mrf.mxu0
    %v151 = vadd.f32 %v87, %v150
    %v152 = vpop.f32.mrf.mxu0
    %153 = vdwg.mxu0
    %154 = vmatpush.bf16.msra.mxu0 0
    %155 = vmatpush.bf16.msra.mxu0 0
    %156 = vmatpush.bf16.msra.mxu0 0
    %157 = vmatpush.bf16.msra.mxu0 0
    %158 = vmatpush.bf16.msra.mxu0 0
    %159 = vmatpush.bf16.msra.mxu0 0
    %160 = vmatpush.bf16.msra.mxu0 %v117
    %161 = vmatpush.bf16.msra.mxu0 %v114
    %162 = vmatmul.bf16.gmra.mxu0 %v126
    %v163 = vpop.f32.mrf.mxu0
    %v164 = vadd.f32 %v88, %v163
    %v165 = vpop.f32.mrf.mxu0
    %166 = vdwg.mxu0
    %v167 = vmax.f32 %v138, 0.0
    %v168 = vmax.f32 %v151, 0.0
    %v169 = vmax.f32 %v164, 0.0
    %v170 = vld [vmem:[%s1] sm:$0xff]
    %v171 = vpack.c.bf16 %v170, %v170
    %v172 = vld [vmem:[%s4] sm:$0xff]
    %v173 = vld [vmem:[%s4 + $0x8] sm:$0xff]
    %v174 = vld [vmem:[%s4 + $0x10] sm:$0xf]
    %v175 = vld [vmem:[%s5] sm:$0x1f]
    %v177 = vperm.slane %v175, 0
    %v178 = vperm.slane %v175, 1
    %v179 = vperm.slane %v175, 2
    %v180 = vperm.slane %v175, 3
    %v181 = vperm.slane %v175, 4
    %v190 = vunpack.c.l.b16 %v172
    %v191 = vunpack.c.h.b16 %v172
    %v192 = vunpack.c.l.b16 %v173
    %v193 = vunpack.c.h.b16 %v173
    %v194 = vunpack.c.l.b16 %v174
    %v195 = vpack.c.b16 %v190, %v190
    %v196 = vpack.c.b16 %v191, %v191
    %v197 = vpack.c.b16 %v192, %v192
    %v198 = vpack.c.b16 %v193, %v193
    %v199 = vpack.c.b16 %v194, %v194
    %vm200 = vcmask 64512
    %v202 = vsel %vm200, %v171, 0
    %vm204 = vcmask 1043456
    %v206 = vsel %vm204, %v195, 0
    %v209 = vsel %vm204, %v196, 0
    %v212 = vsel %vm204, %v197, 0
    %v215 = vsel %vm204, %v198, 0
    %v218 = vsel %vm204, %v199, 0
    %220 = vmatpush.bf16.msra.mxu0 0
    %221 = vmatpush.bf16.msra.mxu0 0
    %222 = vmatpush.bf16.msra.mxu0 0
    %223 = vmatpush.bf16.msra.mxu0 0
    %224 = vmatpush.bf16.msra.mxu0 0
    %225 = vmatpush.bf16.msra.mxu0 0
    %226 = vmatpush.bf16.msra.mxu0 0
    %227 = vmatpush.bf16.msra.mxu0 %v206
    %228 = vmatmul.bf16.gmra.mxu0 %v202
    %v229 = vpop.f32.mrf.mxu0
    %v230 = vadd.f32 %v177, %v229
    %v231 = vpop.f32.mrf.mxu0
    %232 = vdwg.mxu0
    %233 = vmatpush.bf16.msra.mxu0 0
    %234 = vmatpush.bf16.msra.mxu0 0
    %235 = vmatpush.bf16.msra.mxu0 0
    %236 = vmatpush.bf16.msra.mxu0 0
    %237 = vmatpush.bf16.msra.mxu0 0
    %238 = vmatpush.bf16.msra.mxu0 0
    %239 = vmatpush.bf16.msra.mxu0 0
    %240 = vmatpush.bf16.msra.mxu0 %v209
    %241 = vmatmul.bf16.gmra.mxu0 %v202
    %v242 = vpop.f32.mrf.mxu0
    %v243 = vadd.f32 %v178, %v242
    %v244 = vpop.f32.mrf.mxu0
    %245 = vdwg.mxu0
    %246 = vmatpush.bf16.msra.mxu0 0
    %247 = vmatpush.bf16.msra.mxu0 0
    %248 = vmatpush.bf16.msra.mxu0 0
    %249 = vmatpush.bf16.msra.mxu0 0
    %250 = vmatpush.bf16.msra.mxu0 0
    %251 = vmatpush.bf16.msra.mxu0 0
    %252 = vmatpush.bf16.msra.mxu0 0
    %253 = vmatpush.bf16.msra.mxu0 %v212
    %254 = vmatmul.bf16.gmra.mxu0 %v202
    %v255 = vpop.f32.mrf.mxu0
    %v256 = vadd.f32 %v179, %v255
    %v257 = vpop.f32.mrf.mxu0
    %258 = vdwg.mxu0
    %259 = vmatpush.bf16.msra.mxu0 0
    %260 = vmatpush.bf16.msra.mxu0 0
    %261 = vmatpush.bf16.msra.mxu0 0
    %262 = vmatpush.bf16.msra.mxu0 0
    %263 = vmatpush.bf16.msra.mxu0 0
    %264 = vmatpush.bf16.msra.mxu0 0
    %265 = vmatpush.bf16.msra.mxu0 0
    %266 = vmatpush.bf16.msra.mxu0 %v215
    %267 = vmatmul.bf16.gmra.mxu0 %v202
    %v268 = vpop.f32.mrf.mxu0
    %v269 = vadd.f32 %v180, %v268
    %v270 = vpop.f32.mrf.mxu0
    %271 = vdwg.mxu0
    %272 = vmatpush.bf16.msra.mxu0 0
    %273 = vmatpush.bf16.msra.mxu0 0
    %274 = vmatpush.bf16.msra.mxu0 0
    %275 = vmatpush.bf16.msra.mxu0 0
    %276 = vmatpush.bf16.msra.mxu0 0
    %277 = vmatpush.bf16.msra.mxu0 0
    %278 = vmatpush.bf16.msra.mxu0 0
    %279 = vmatpush.bf16.msra.mxu0 %v218
    %280 = vmatmul.bf16.gmra.mxu0 %v202
    %v281 = vpop.f32.mrf.mxu0
    %v282 = vadd.f32 %v181, %v281
    %v283 = vpop.f32.mrf.mxu0
    %284 = vdwg.mxu0
    %v285 = vpack.c.bf16 %v167, %v167
    %v286 = vpack.c.bf16 %v168, %v168
    %v287 = vpack.c.bf16 %v169, %v169
    %v288 = vld [vmem:[#allocation2] sm:$0xff]
    %v289 = vld [vmem:[#allocation2 + $0x8] sm:$0xff]
    %v290 = vld [vmem:[#allocation2 + $0x10] sm:$0xf]
    %v291 = vld [vmem:[#allocation2 + $0x14] sm:$0xff]
    %v292 = vld [vmem:[#allocation2 + $0x1c] sm:$0xff]
    %v293 = vld [vmem:[#allocation2 + $0x24] sm:$0xf]
    %v294 = vld [vmem:[#allocation2 + $0x28] sm:$0xff]
    %v295 = vld [vmem:[#allocation2 + $0x30] sm:$0xff]
    %v296 = vld [vmem:[#allocation2 + $0x38] sm:$0xf]
    %v297 = vld [vmem:[#allocation2 + $0x3c] sm:$0xff]
    %v298 = vld [vmem:[#allocation2 + $0x44] sm:$0xff]
    %v299 = vld [vmem:[#allocation2 + $0x4c] sm:$0xf]
    %v300 = vld [vmem:[#allocation2 + $0x50] sm:$0xff]
    %v301 = vld [vmem:[#allocation2 + $0x58] sm:$0xff]
    %v302 = vld [vmem:[#allocation2 + $0x60] sm:$0xf]
    %v303 = vld [vmem:[#allocation2 + $0x64] sm:$0xff]
    %v304 = vld [vmem:[#allocation2 + $0x6c] sm:$0xff]
    %v305 = vld [vmem:[#allocation2 + $0x74] sm:$0xf]
    %v306 = vld [vmem:[#allocation2 + $0x78] sm:$0xff]
    %v307 = vld [vmem:[#allocation2 + $0x80] sm:$0xff]
    %v308 = vld [vmem:[#allocation2 + $0x88] sm:$0xf]
    %v309 = vld [vmem:[#allocation2 + $0x8c] sm:$0xff]
    %v310 = vld [vmem:[#allocation2 + $0x94] sm:$0xff]
    %v311 = vld [vmem:[#allocation2 + $0x9c] sm:$0xf]
    %v312 = vld [vmem:[#allocation2 + $0xa0] sm:$0xff]
    %v313 = vld [vmem:[#allocation2 + $0xa8] sm:$0xff]
    %v314 = vld [vmem:[#allocation2 + $0xb0] sm:$0xf]
    %v315 = vld [vmem:[#allocation2 + $0xb4] sm:$0xff]
    %v316 = vld [vmem:[#allocation2 + $0xbc] sm:$0xff]
    %v317 = vld [vmem:[#allocation2 + $0xc4] sm:$0xf]
    %v318 = vld [vmem:[#allocation2 + $0xc8] sm:$0xff]
    %v319 = vld [vmem:[#allocation2 + $0xd0] sm:$0xff]
    %v320 = vld [vmem:[#allocation2 + $0xd8] sm:$0xf]
    %v321 = vld [vmem:[#allocation2 + $0xdc] sm:$0xff]
    %v322 = vld [vmem:[#allocation2 + $0xe4] sm:$0xff]
    %v323 = vld [vmem:[#allocation2 + $0xec] sm:$0xf]
    %v324 = vld [vmem:[#allocation2 + $0xf0] sm:$0xff]
    %v325 = vld [vmem:[#allocation2 + $0xf8] sm:$0xff]
    %v326 = vld [vmem:[#allocation2 + $0x100] sm:$0xf]
    %v327 = vld [vmem:[#allocation2 + $0x104] sm:$0xff]
    %v328 = vld [vmem:[#allocation2 + $0x10c] sm:$0xff]
    %v329 = vld [vmem:[#allocation2 + $0x114] sm:$0xf]
    %v330 = vld [vmem:[#allocation2 + $0x118] sm:$0xff]
    %v331 = vld [vmem:[#allocation2 + $0x120] sm:$0xff]
    %v332 = vld [vmem:[#allocation2 + $0x128] sm:$0xf]
    %v333 = vld [vmem:[#allocation2 + $0x12c] sm:$0xff]
    %v334 = vld [vmem:[#allocation2 + $0x134] sm:$0xff]
    %v335 = vld [vmem:[#allocation2 + $0x13c] sm:$0xf]
    %v336 = vld [vmem:[#allocation2 + $0x140] sm:$0xff]
    %v337 = vld [vmem:[#allocation2 + $0x148] sm:$0xff]
    %v338 = vld [vmem:[#allocation2 + $0x150] sm:$0xf]
    %v339 = vld [vmem:[#allocation2 + $0x154] sm:$0xff]
    %v340 = vld [vmem:[#allocation2 + $0x15c] sm:$0xff]
    %v341 = vld [vmem:[#allocation2 + $0x164] sm:$0xf]
    %v342 = vld [vmem:[#allocation2 + $0x168] sm:$0xff]
    %v343 = vld [vmem:[#allocation2 + $0x170] sm:$0xff]
    %v344 = vld [vmem:[#allocation2 + $0x178] sm:$0xf]
    %v345 = vld [vmem:[#allocation2 + $0x17c] sm:$0xff]
    %v346 = vld [vmem:[#allocation2 + $0x184] sm:$0xff]
    %v347 = vld [vmem:[#allocation2 + $0x18c] sm:$0xf]
    %v348 = vld [vmem:[#allocation2 + $0x190] sm:$0xff]
    %v349 = vld [vmem:[#allocation2 + $0x198] sm:$0xff]
    %v350 = vld [vmem:[#allocation2 + $0x1a0] sm:$0xf]
    %v351 = vld [vmem:[#allocation2 + $0x1a4] sm:$0xff]
    %v352 = vld [vmem:[#allocation2 + $0x1ac] sm:$0xff]
    %v353 = vld [vmem:[#allocation2 + $0x1b4] sm:$0xf]
    %v354 = vld [vmem:[#allocation2 + $0x1b8] sm:$0xff]
    %v355 = vld [vmem:[#allocation2 + $0x1c0] sm:$0xff]
    %v356 = vld [vmem:[#allocation2 + $0x1c8] sm:$0xf]
    %v357 = vld [vmem:[#allocation2 + $0x1cc] sm:$0xff]
    %v358 = vld [vmem:[#allocation2 + $0x1d4] sm:$0xff]
    %v359 = vld [vmem:[#allocation2 + $0x1dc] sm:$0xf]
    %v360 = vld [vmem:[#allocation2 + $0x1e0] sm:$0xff]
    %v361 = vld [vmem:[#allocation2 + $0x1e8] sm:$0xff]
    %v362 = vld [vmem:[#allocation2 + $0x1f0] sm:$0xf]
    %v363 = vld [vmem:[#allocation2 + $0x1f4] sm:$0xff]
    %v364 = vld [vmem:[#allocation2 + $0x1fc] sm:$0xff]
    %v365 = vld [vmem:[#allocation2 + $0x204] sm:$0xf]
    %v366 = vld [vmem:[#allocation2 + $0x208] sm:$0xff]
    %v367 = vld [vmem:[#allocation2 + $0x210] sm:$0xff]
    %v368 = vld [vmem:[#allocation2 + $0x218] sm:$0xf]
    %v369 = vld [vmem:[#allocation2 + $0x21c] sm:$0xff]
    %v370 = vld [vmem:[#allocation2 + $0x224] sm:$0xff]
    %v371 = vld [vmem:[#allocation2 + $0x22c] sm:$0xf]
    %v372 = vld [vmem:[#allocation2 + $0x230] sm:$0xff]
    %v373 = vld [vmem:[#allocation2 + $0x238] sm:$0xff]
    %v374 = vld [vmem:[#allocation2 + $0x240] sm:$0xf]
    %v375 = vld [vmem:[#allocation2 + $0x244] sm:$0xff]
    %v376 = vld [vmem:[#allocation2 + $0x24c] sm:$0xff]
    %v377 = vld [vmem:[#allocation2 + $0x254] sm:$0xf]
    %v378 = vld [vmem:[#allocation2 + $0x258] sm:$0xff]
    %v379 = vld [vmem:[#allocation2 + $0x260] sm:$0xff]
    %v380 = vld [vmem:[#allocation2 + $0x268] sm:$0xf]
    %v381 = vld [vmem:[#allocation2 + $0x26c] sm:$0xff]
    %v382 = vld [vmem:[#allocation2 + $0x274] sm:$0xff]
    %v383 = vld [vmem:[#allocation2 + $0x27c] sm:$0xf]
    %v384 = vld [vmem:[#allocation2 + $0x280] sm:$0xff]
    %v385 = vld [vmem:[#allocation2 + $0x288] sm:$0xff]
    %v386 = vld [vmem:[#allocation2 + $0x290] sm:$0xf]
    %v387 = vld [vmem:[#allocation2 + $0x294] sm:$0xff]
    %v388 = vld [vmem:[#allocation2 + $0x29c] sm:$0xff]
    %v389 = vld [vmem:[#allocation2 + $0x2a4] sm:$0xf]
    %v390 = vld [vmem:[#allocation2 + $0x2a8] sm:$0xff]
    %v391 = vld [vmem:[#allocation2 + $0x2b0] sm:$0xff]
    %v392 = vld [vmem:[#allocation2 + $0x2b8] sm:$0xf]
    %v393 = vld [vmem:[#allocation2 + $0x2bc] sm:$0xff]
    %v394 = vld [vmem:[#allocation2 + $0x2c4] sm:$0xff]
    %v395 = vld [vmem:[#allocation2 + $0x2cc] sm:$0xf]
    %v396 = vld [vmem:[#allocation2 + $0x2d0] sm:$0xff]
    %v397 = vld [vmem:[#allocation2 + $0x2d8] sm:$0xff]
    %v398 = vld [vmem:[#allocation2 + $0x2e0] sm:$0xf]
    %v399 = vld [vmem:[#allocation2 + $0x2e4] sm:$0xff]
    %v400 = vld [vmem:[#allocation2 + $0x2ec] sm:$0xff]
    %v401 = vld [vmem:[#allocation2 + $0x2f4] sm:$0xf]
    %v402 = vld [vmem:[#allocation2 + $0x2f8] sm:$0xff]
    %v403 = vld [vmem:[#allocation2 + $0x300] sm:$0xff]
    %v404 = vld [vmem:[#allocation2 + $0x308] sm:$0xf]
    %v405 = vld [vmem:[#allocation2 + $0x30c] sm:$0xff]
    %v406 = vld [vmem:[#allocation2 + $0x314] sm:$0xff]
    %v407 = vld [vmem:[#allocation2 + $0x31c] sm:$0xf]
    %v408 = vld [vmem:[#allocation2 + $0x320] sm:$0xff]
    %v409 = vld [vmem:[#allocation2 + $0x328] sm:$0xff]
    %v410 = vld [vmem:[#allocation2 + $0x330] sm:$0xf]
    %v411 = vld [vmem:[#allocation2 + $0x334] sm:$0xff]
    %v412 = vld [vmem:[#allocation2 + $0x33c] sm:$0xff]
    %v413 = vld [vmem:[#allocation2 + $0x344] sm:$0xf]
    %v414 = vld [vmem:[#allocation2 + $0x348] sm:$0xff]
    %v415 = vld [vmem:[#allocation2 + $0x350] sm:$0xff]
    %v416 = vld [vmem:[#allocation2 + $0x358] sm:$0xf]
    %v417 = vld [vmem:[#allocation2 + $0x35c] sm:$0xff]
    %v418 = vld [vmem:[#allocation2 + $0x364] sm:$0xff]
    %v419 = vld [vmem:[#allocation2 + $0x36c] sm:$0xf]
    %v420 = vld [vmem:[#allocation2 + $0x370] sm:$0xff]
    %v421 = vld [vmem:[#allocation2 + $0x378] sm:$0xff]
    %v422 = vld [vmem:[#allocation2 + $0x380] sm:$0xf]
    %v423 = vld [vmem:[#allocation2 + $0x384] sm:$0xff]
    %v424 = vld [vmem:[#allocation2 + $0x38c] sm:$0xff]
    %v425 = vld [vmem:[#allocation2 + $0x394] sm:$0xf]
    %v426 = vld [vmem:[#allocation2 + $0x398] sm:$0xff]
    %v427 = vld [vmem:[#allocation2 + $0x3a0] sm:$0xff]
    %v428 = vld [vmem:[#allocation2 + $0x3a8] sm:$0xf]
    %v429 = vld [vmem:[#allocation2 + $0x3ac] sm:$0xff]
    %v430 = vld [vmem:[#allocation2 + $0x3b4] sm:$0xff]
    %v431 = vld [vmem:[#allocation2 + $0x3bc] sm:$0xf]
    %v432 = vld [vmem:[%s7] sm:$0x1f]
    %v434 = vperm.slane %v432, 0
    %v435 = vperm.slane %v432, 1
    %v436 = vperm.slane %v432, 2
    %v437 = vperm.slane %v432, 3
    %v438 = vperm.slane %v432, 4
    %v588 = vunpack.c.l.b16 %v288
    %v589 = vunpack.c.h.b16 %v288
    %v590 = vunpack.c.l.b16 %v289
    %v591 = vunpack.c.h.b16 %v289
    %v592 = vunpack.c.l.b16 %v290
    %v593 = vunpack.c.l.b16 %v291
    %v594 = vunpack.c.h.b16 %v291
    %v595 = vunpack.c.l.b16 %v292
    %v596 = vunpack.c.h.b16 %v292
    %v597 = vunpack.c.l.b16 %v293
    %v598 = vunpack.c.l.b16 %v294
    %v599 = vunpack.c.h.b16 %v294
    %v600 = vunpack.c.l.b16 %v295
    %v601 = vunpack.c.h.b16 %v295
    %v602 = vunpack.c.l.b16 %v296
    %v603 = vunpack.c.l.b16 %v297
    %v604 = vunpack.c.h.b16 %v297
    %v605 = vunpack.c.l.b16 %v298
    %v606 = vunpack.c.h.b16 %v298
    %v607 = vunpack.c.l.b16 %v299
    %v608 = vunpack.c.l.b16 %v300
    %v609 = vunpack.c.h.b16 %v300
    %v610 = vunpack.c.l.b16 %v301
    %v611 = vunpack.c.h.b16 %v301
    %v612 = vunpack.c.l.b16 %v302
    %v613 = vunpack.c.l.b16 %v303
    %v614 = vunpack.c.h.b16 %v303
    %v615 = vunpack.c.l.b16 %v304
    %v616 = vunpack.c.h.b16 %v304
    %v617 = vunpack.c.l.b16 %v305
    %v618 = vunpack.c.l.b16 %v306
    %v619 = vunpack.c.h.b16 %v306
    %v620 = vunpack.c.l.b16 %v307
    %v621 = vunpack.c.h.b16 %v307
    %v622 = vunpack.c.l.b16 %v308
    %v623 = vunpack.c.l.b16 %v309
    %v624 = vunpack.c.h.b16 %v309
    %v625 = vunpack.c.l.b16 %v310
    %v626 = vunpack.c.h.b16 %v310
    %v627 = vunpack.c.l.b16 %v311
    %v628 = vunpack.c.l.b16 %v312
    %v629 = vunpack.c.h.b16 %v312
    %v630 = vunpack.c.l.b16 %v313
    %v631 = vunpack.c.h.b16 %v313
    %v632 = vunpack.c.l.b16 %v314
    %v633 = vunpack.c.l.b16 %v315
    %v634 = vunpack.c.h.b16 %v315
    %v635 = vunpack.c.l.b16 %v316
    %v636 = vunpack.c.h.b16 %v316
    %v637 = vunpack.c.l.b16 %v317
    %v638 = vunpack.c.l.b16 %v318
    %v639 = vunpack.c.h.b16 %v318
    %v640 = vunpack.c.l.b16 %v319
    %v641 = vunpack.c.h.b16 %v319
    %v642 = vunpack.c.l.b16 %v320
    %v643 = vunpack.c.l.b16 %v321
    %v644 = vunpack.c.h.b16 %v321
    %v645 = vunpack.c.l.b16 %v322
    %v646 = vunpack.c.h.b16 %v322
    %v647 = vunpack.c.l.b16 %v323
    %v648 = vunpack.c.l.b16 %v324
    %v649 = vunpack.c.h.b16 %v324
    %v650 = vunpack.c.l.b16 %v325
    %v651 = vunpack.c.h.b16 %v325
    %v652 = vunpack.c.l.b16 %v326
    %v653 = vunpack.c.l.b16 %v327
    %v654 = vunpack.c.h.b16 %v327
    %v655 = vunpack.c.l.b16 %v328
    %v656 = vunpack.c.h.b16 %v328
    %v657 = vunpack.c.l.b16 %v329
    %v658 = vunpack.c.l.b16 %v330
    %v659 = vunpack.c.h.b16 %v330
    %v660 = vunpack.c.l.b16 %v331
    %v661 = vunpack.c.h.b16 %v331
    %v662 = vunpack.c.l.b16 %v332
    %v663 = vunpack.c.l.b16 %v333
    %v664 = vunpack.c.h.b16 %v333
    %v665 = vunpack.c.l.b16 %v334
    %v666 = vunpack.c.h.b16 %v334
    %v667 = vunpack.c.l.b16 %v335
    %v668 = vunpack.c.l.b16 %v336
    %v669 = vunpack.c.h.b16 %v336
    %v670 = vunpack.c.l.b16 %v337
    %v671 = vunpack.c.h.b16 %v337
    %v672 = vunpack.c.l.b16 %v338
    %v673 = vunpack.c.l.b16 %v339
    %v674 = vunpack.c.h.b16 %v339
    %v675 = vunpack.c.l.b16 %v340
    %v676 = vunpack.c.h.b16 %v340
    %v677 = vunpack.c.l.b16 %v341
    %v678 = vunpack.c.l.b16 %v342
    %v679 = vunpack.c.h.b16 %v342
    %v680 = vunpack.c.l.b16 %v343
    %v681 = vunpack.c.h.b16 %v343
    %v682 = vunpack.c.l.b16 %v344
    %v683 = vunpack.c.l.b16 %v345
    %v684 = vunpack.c.h.b16 %v345
    %v685 = vunpack.c.l.b16 %v346
    %v686 = vunpack.c.h.b16 %v346
    %v687 = vunpack.c.l.b16 %v347
    %v688 = vunpack.c.l.b16 %v348
    %v689 = vunpack.c.h.b16 %v348
    %v690 = vunpack.c.l.b16 %v349
    %v691 = vunpack.c.h.b16 %v349
    %v692 = vunpack.c.l.b16 %v350
    %v693 = vunpack.c.l.b16 %v351
    %v694 = vunpack.c.h.b16 %v351
    %v695 = vunpack.c.l.b16 %v352
    %v696 = vunpack.c.h.b16 %v352
    %v697 = vunpack.c.l.b16 %v353
    %v698 = vunpack.c.l.b16 %v354
    %v699 = vunpack.c.h.b16 %v354
    %v700 = vunpack.c.l.b16 %v355
    %v701 = vunpack.c.h.b16 %v355
    %v702 = vunpack.c.l.b16 %v356
    %v703 = vunpack.c.l.b16 %v357
    %v704 = vunpack.c.h.b16 %v357
    %v705 = vunpack.c.l.b16 %v358
    %v706 = vunpack.c.h.b16 %v358
    %v707 = vunpack.c.l.b16 %v359
    %v708 = vunpack.c.l.b16 %v360
    %v709 = vunpack.c.h.b16 %v360
    %v710 = vunpack.c.l.b16 %v361
    %v711 = vunpack.c.h.b16 %v361
    %v712 = vunpack.c.l.b16 %v362
    %v713 = vunpack.c.l.b16 %v363
    %v714 = vunpack.c.h.b16 %v363
    %v715 = vunpack.c.l.b16 %v364
    %v716 = vunpack.c.h.b16 %v364
    %v717 = vunpack.c.l.b16 %v365
    %v718 = vunpack.c.l.b16 %v366
    %v719 = vunpack.c.h.b16 %v366
    %v720 = vunpack.c.l.b16 %v367
    %v721 = vunpack.c.h.b16 %v367
    %v722 = vunpack.c.l.b16 %v368
    %v723 = vunpack.c.l.b16 %v369
    %v724 = vunpack.c.h.b16 %v369
    %v725 = vunpack.c.l.b16 %v370
    %v726 = vunpack.c.h.b16 %v370
    %v727 = vunpack.c.l.b16 %v371
    %v728 = vunpack.c.l.b16 %v372
    %v729 = vunpack.c.h.b16 %v372
    %v730 = vunpack.c.l.b16 %v373
    %v731 = vunpack.c.h.b16 %v373
    %v732 = vunpack.c.l.b16 %v374
    %v733 = vunpack.c.l.b16 %v375
    %v734 = vunpack.c.h.b16 %v375
    %v735 = vunpack.c.l.b16 %v376
    %v736 = vunpack.c.h.b16 %v376
    %v737 = vunpack.c.l.b16 %v377
    %v738 = vunpack.c.l.b16 %v378
    %v739 = vunpack.c.h.b16 %v378
    %v740 = vunpack.c.l.b16 %v379
    %v741 = vunpack.c.h.b16 %v379
    %v742 = vunpack.c.l.b16 %v380
    %v743 = vunpack.c.l.b16 %v381
    %v744 = vunpack.c.h.b16 %v381
    %v745 = vunpack.c.l.b16 %v382
    %v746 = vunpack.c.h.b16 %v382
    %v747 = vunpack.c.l.b16 %v383
    %v748 = vunpack.c.l.b16 %v384
    %v749 = vunpack.c.h.b16 %v384
    %v750 = vunpack.c.l.b16 %v385
    %v751 = vunpack.c.h.b16 %v385
    %v752 = vunpack.c.l.b16 %v386
    %v753 = vunpack.c.l.b16 %v387
    %v754 = vunpack.c.h.b16 %v387
    %v755 = vunpack.c.l.b16 %v388
    %v756 = vunpack.c.h.b16 %v388
    %v757 = vunpack.c.l.b16 %v389
    %v758 = vunpack.c.l.b16 %v390
    %v759 = vunpack.c.h.b16 %v390
    %v760 = vunpack.c.l.b16 %v391
    %v761 = vunpack.c.h.b16 %v391
    %v762 = vunpack.c.l.b16 %v392
    %v763 = vunpack.c.l.b16 %v393
    %v764 = vunpack.c.h.b16 %v393
    %v765 = vunpack.c.l.b16 %v394
    %v766 = vunpack.c.h.b16 %v394
    %v767 = vunpack.c.l.b16 %v395
    %v768 = vunpack.c.l.b16 %v396
    %v769 = vunpack.c.h.b16 %v396
    %v770 = vunpack.c.l.b16 %v397
    %v771 = vunpack.c.h.b16 %v397
    %v772 = vunpack.c.l.b16 %v398
    %v773 = vunpack.c.l.b16 %v399
    %v774 = vunpack.c.h.b16 %v399
    %v775 = vunpack.c.l.b16 %v400
    %v776 = vunpack.c.h.b16 %v400
    %v777 = vunpack.c.l.b16 %v401
    %v778 = vunpack.c.l.b16 %v402
    %v779 = vunpack.c.h.b16 %v402
    %v780 = vunpack.c.l.b16 %v403
    %v781 = vunpack.c.h.b16 %v403
    %v782 = vunpack.c.l.b16 %v404
    %v783 = vunpack.c.l.b16 %v405
    %v784 = vunpack.c.h.b16 %v405
    %v785 = vunpack.c.l.b16 %v406
    %v786 = vunpack.c.h.b16 %v406
    %v787 = vunpack.c.l.b16 %v407
    %v788 = vunpack.c.l.b16 %v408
    %v789 = vunpack.c.h.b16 %v408
    %v790 = vunpack.c.l.b16 %v409
    %v791 = vunpack.c.h.b16 %v409
    %v792 = vunpack.c.l.b16 %v410
    %v793 = vunpack.c.l.b16 %v411
    %v794 = vunpack.c.h.b16 %v411
    %v795 = vunpack.c.l.b16 %v412
    %v796 = vunpack.c.h.b16 %v412
    %v797 = vunpack.c.l.b16 %v413
    %v798 = vunpack.c.l.b16 %v414
    %v799 = vunpack.c.h.b16 %v414
    %v800 = vunpack.c.l.b16 %v415
    %v801 = vunpack.c.h.b16 %v415
    %v802 = vunpack.c.l.b16 %v416
    %v803 = vunpack.c.l.b16 %v417
    %v804 = vunpack.c.h.b16 %v417
    %v805 = vunpack.c.l.b16 %v418
    %v806 = vunpack.c.h.b16 %v418
    %v807 = vunpack.c.l.b16 %v419
    %v808 = vunpack.c.l.b16 %v420
    %v809 = vunpack.c.h.b16 %v420
    %v810 = vunpack.c.l.b16 %v421
    %v811 = vunpack.c.h.b16 %v421
    %v812 = vunpack.c.l.b16 %v422
    %v813 = vunpack.c.l.b16 %v423
    %v814 = vunpack.c.h.b16 %v423
    %v815 = vunpack.c.l.b16 %v424
    %v816 = vunpack.c.h.b16 %v424
    %v817 = vunpack.c.l.b16 %v425
    %v818 = vunpack.c.l.b16 %v426
    %v819 = vunpack.c.h.b16 %v426
    %v820 = vunpack.c.l.b16 %v427
    %v821 = vunpack.c.h.b16 %v427
    %v822 = vunpack.c.l.b16 %v428
    %v823 = vunpack.c.l.b16 %v429
    %v824 = vunpack.c.h.b16 %v429
    %v825 = vunpack.c.l.b16 %v430
    %v826 = vunpack.c.h.b16 %v430
    %v827 = vunpack.c.l.b16 %v431
    %v828 = vpack.c.b16 %v593, %v588
    %v829 = vpack.c.b16 %v594, %v589
    %v830 = vpack.c.b16 %v595, %v590
    %v831 = vpack.c.b16 %v596, %v591
    %v832 = vpack.c.b16 %v597, %v592
    %v833 = vpack.c.b16 %v603, %v598
    %v834 = vpack.c.b16 %v604, %v599
    %v835 = vpack.c.b16 %v605, %v600
    %v836 = vpack.c.b16 %v606, %v601
    %v837 = vpack.c.b16 %v607, %v602
    %v838 = vpack.c.b16 %v613, %v608
    %v839 = vpack.c.b16 %v614, %v609
    %v840 = vpack.c.b16 %v615, %v610
    %v841 = vpack.c.b16 %v616, %v611
    %v842 = vpack.c.b16 %v617, %v612
    %v843 = vpack.c.b16 %v623, %v618
    %v844 = vpack.c.b16 %v624, %v619
    %v845 = vpack.c.b16 %v625, %v620
    %v846 = vpack.c.b16 %v626, %v621
    %v847 = vpack.c.b16 %v627, %v622
    %v848 = vpack.c.b16 %v633, %v628
    %v849 = vpack.c.b16 %v634, %v629
    %v850 = vpack.c.b16 %v635, %v630
    %v851 = vpack.c.b16 %v636, %v631
    %v852 = vpack.c.b16 %v637, %v632
    %v853 = vpack.c.b16 %v643, %v638
    %v854 = vpack.c.b16 %v644, %v639
    %v855 = vpack.c.b16 %v645, %v640
    %v856 = vpack.c.b16 %v646, %v641
    %v857 = vpack.c.b16 %v647, %v642
    %v858 = vpack.c.b16 %v653, %v648
    %v859 = vpack.c.b16 %v654, %v649
    %v860 = vpack.c.b16 %v655, %v650
    %v861 = vpack.c.b16 %v656, %v651
    %v862 = vpack.c.b16 %v657, %v652
    %v863 = vpack.c.b16 %v663, %v658
    %v864 = vpack.c.b16 %v664, %v659
    %v865 = vpack.c.b16 %v665, %v660
    %v866 = vpack.c.b16 %v666, %v661
    %v867 = vpack.c.b16 %v667, %v662
    %v868 = vpack.c.b16 %v673, %v668
    %v869 = vpack.c.b16 %v674, %v669
    %v870 = vpack.c.b16 %v675, %v670
    %v871 = vpack.c.b16 %v676, %v671
    %v872 = vpack.c.b16 %v677, %v672
    %v873 = vpack.c.b16 %v683, %v678
    %v874 = vpack.c.b16 %v684, %v679
    %v875 = vpack.c.b16 %v685, %v680
    %v876 = vpack.c.b16 %v686, %v681
    %v877 = vpack.c.b16 %v687, %v682
    %v878 = vpack.c.b16 %v693, %v688
    %v879 = vpack.c.b16 %v694, %v689
    %v880 = vpack.c.b16 %v695, %v690
    %v881 = vpack.c.b16 %v696, %v691
    %v882 = vpack.c.b16 %v697, %v692
    %v883 = vpack.c.b16 %v703, %v698
    %v884 = vpack.c.b16 %v704, %v699
    %v885 = vpack.c.b16 %v705, %v700
    %v886 = vpack.c.b16 %v706, %v701
    %v887 = vpack.c.b16 %v707, %v702
    %v888 = vpack.c.b16 %v713, %v708
    %v889 = vpack.c.b16 %v714, %v709
    %v890 = vpack.c.b16 %v715, %v710
    %v891 = vpack.c.b16 %v716, %v711
    %v892 = vpack.c.b16 %v717, %v712
    %v893 = vpack.c.b16 %v723, %v718
    %v894 = vpack.c.b16 %v724, %v719
    %v895 = vpack.c.b16 %v725, %v720
    %v896 = vpack.c.b16 %v726, %v721
    %v897 = vpack.c.b16 %v727, %v722
    %v898 = vpack.c.b16 %v733, %v728
    %v899 = vpack.c.b16 %v734, %v729
    %v900 = vpack.c.b16 %v735, %v730
    %v901 = vpack.c.b16 %v736, %v731
    %v902 = vpack.c.b16 %v737, %v732
    %v903 = vpack.c.b16 %v743, %v738
    %v904 = vpack.c.b16 %v744, %v739
    %v905 = vpack.c.b16 %v745, %v740
    %v906 = vpack.c.b16 %v746, %v741
    %v907 = vpack.c.b16 %v747, %v742
    %v908 = vpack.c.b16 %v753, %v748
    %v909 = vpack.c.b16 %v754, %v749
    %v910 = vpack.c.b16 %v755, %v750
    %v911 = vpack.c.b16 %v756, %v751
    %v912 = vpack.c.b16 %v757, %v752
    %v913 = vpack.c.b16 %v763, %v758
    %v914 = vpack.c.b16 %v764, %v759
    %v915 = vpack.c.b16 %v765, %v760
    %v916 = vpack.c.b16 %v766, %v761
    %v917 = vpack.c.b16 %v767, %v762
    %v918 = vpack.c.b16 %v773, %v768
    %v919 = vpack.c.b16 %v774, %v769
    %v920 = vpack.c.b16 %v775, %v770
    %v921 = vpack.c.b16 %v776, %v771
    %v922 = vpack.c.b16 %v777, %v772
    %v923 = vpack.c.b16 %v783, %v778
    %v924 = vpack.c.b16 %v784, %v779
    %v925 = vpack.c.b16 %v785, %v780
    %v926 = vpack.c.b16 %v786, %v781
    %v927 = vpack.c.b16 %v787, %v782
    %v928 = vpack.c.b16 %v793, %v788
    %v929 = vpack.c.b16 %v794, %v789
    %v930 = vpack.c.b16 %v795, %v790
    %v931 = vpack.c.b16 %v796, %v791
    %v932 = vpack.c.b16 %v797, %v792
    %v933 = vpack.c.b16 %v803, %v798
    %v934 = vpack.c.b16 %v804, %v799
    %v935 = vpack.c.b16 %v805, %v800
    %v936 = vpack.c.b16 %v806, %v801
    %v937 = vpack.c.b16 %v807, %v802
    %v938 = vpack.c.b16 %v813, %v808
    %v939 = vpack.c.b16 %v814, %v809
    %v940 = vpack.c.b16 %v815, %v810
    %v941 = vpack.c.b16 %v816, %v811
    %v942 = vpack.c.b16 %v817, %v812
    %v943 = vpack.c.b16 %v823, %v818
    %v944 = vpack.c.b16 %v824, %v819
    %v945 = vpack.c.b16 %v825, %v820
    %v946 = vpack.c.b16 %v826, %v821
    %v947 = vpack.c.b16 %v827, %v822
    %1068 = vmatpush.bf16.msra.mxu0 %v863
    %1069 = vmatpush.bf16.msra.mxu0 %v858
    %1070 = vmatpush.bf16.msra.mxu0 %v853
    %1071 = vmatpush.bf16.msra.mxu0 %v848
    %1072 = vmatpush.bf16.msra.mxu0 %v843
    %1073 = vmatpush.bf16.msra.mxu0 %v838
    %1074 = vmatpush.bf16.msra.mxu0 %v833
    %1075 = vmatpush.bf16.msra.mxu0 %v828
    %1076 = vmatmul.bf16.gmra.mxu0 %v285
    %v1077 = vpop.f32.mrf.mxu0
    %v1078 = vadd.f32 %v434, %v1077
    %v1079 = vpop.f32.mrf.mxu0
    %1080 = vdwg.mxu0
    %1081 = vmatpush.bf16.msra.mxu0 %v903
    %1082 = vmatpush.bf16.msra.mxu0 %v898
    %1083 = vmatpush.bf16.msra.mxu0 %v893
    %1084 = vmatpush.bf16.msra.mxu0 %v888
    %1085 = vmatpush.bf16.msra.mxu0 %v883
    %1086 = vmatpush.bf16.msra.mxu0 %v878
    %1087 = vmatpush.bf16.msra.mxu0 %v873
    %1088 = vmatpush.bf16.msra.mxu0 %v868
    %1089 = vmatmul.bf16.gmra.mxu0 %v286
    %v1090 = vpop.f32.mrf.mxu0
    %v1091 = vadd.f32 %v1078, %v1090
    %v1092 = vpop.f32.mrf.mxu0
    %1093 = vdwg.mxu0
    %1094 = vmatpush.bf16.msra.mxu0 %v943
    %1095 = vmatpush.bf16.msra.mxu0 %v938
    %1096 = vmatpush.bf16.msra.mxu0 %v933
    %1097 = vmatpush.bf16.msra.mxu0 %v928
    %1098 = vmatpush.bf16.msra.mxu0 %v923
    %1099 = vmatpush.bf16.msra.mxu0 %v918
    %1100 = vmatpush.bf16.msra.mxu0 %v913
    %1101 = vmatpush.bf16.msra.mxu0 %v908
    %1102 = vmatmul.bf16.gmra.mxu0 %v287
    %v1103 = vpop.f32.mrf.mxu0
    %v1104 = vadd.f32 %v1091, %v1103
    %v1105 = vpop.f32.mrf.mxu0
    %1106 = vdwg.mxu0
    %1107 = vmatpush.bf16.msra.mxu0 %v864
    %1108 = vmatpush.bf16.msra.mxu0 %v859
    %1109 = vmatpush.bf16.msra.mxu0 %v854
    %1110 = vmatpush.bf16.msra.mxu0 %v849
    %1111 = vmatpush.bf16.msra.mxu0 %v844
    %1112 = vmatpush.bf16.msra.mxu0 %v839
    %1113 = vmatpush.bf16.msra.mxu0 %v834
    %1114 = vmatpush.bf16.msra.mxu0 %v829
    %1115 = vmatmul.bf16.gmra.mxu0 %v285
    %v1116 = vpop.f32.mrf.mxu0
    %v1117 = vadd.f32 %v435, %v1116
    %v1118 = vpop.f32.mrf.mxu0
    %1119 = vdwg.mxu0
    %1120 = vmatpush.bf16.msra.mxu0 %v904
    %1121 = vmatpush.bf16.msra.mxu0 %v899
    %1122 = vmatpush.bf16.msra.mxu0 %v894
    %1123 = vmatpush.bf16.msra.mxu0 %v889
    %1124 = vmatpush.bf16.msra.mxu0 %v884
    %1125 = vmatpush.bf16.msra.mxu0 %v879
    %1126 = vmatpush.bf16.msra.mxu0 %v874
    %1127 = vmatpush.bf16.msra.mxu0 %v869
    %1128 = vmatmul.bf16.gmra.mxu0 %v286
    %v1129 = vpop.f32.mrf.mxu0
    %v1130 = vadd.f32 %v1117, %v1129
    %v1131 = vpop.f32.mrf.mxu0
    %1132 = vdwg.mxu0
    %1133 = vmatpush.bf16.msra.mxu0 %v944
    %1134 = vmatpush.bf16.msra.mxu0 %v939
    %1135 = vmatpush.bf16.msra.mxu0 %v934
    %1136 = vmatpush.bf16.msra.mxu0 %v929
    %1137 = vmatpush.bf16.msra.mxu0 %v924
    %1138 = vmatpush.bf16.msra.mxu0 %v919
    %1139 = vmatpush.bf16.msra.mxu0 %v914
    %1140 = vmatpush.bf16.msra.mxu0 %v909
    %1141 = vmatmul.bf16.gmra.mxu0 %v287
    %v1142 = vpop.f32.mrf.mxu0
    %v1143 = vadd.f32 %v1130, %v1142
    %v1144 = vpop.f32.mrf.mxu0
    %1145 = vdwg.mxu0
    %1146 = vmatpush.bf16.msra.mxu0 %v865
    %1147 = vmatpush.bf16.msra.mxu0 %v860
    %1148 = vmatpush.bf16.msra.mxu0 %v855
    %1149 = vmatpush.bf16.msra.mxu0 %v850
    %1150 = vmatpush.bf16.msra.mxu0 %v845
    %1151 = vmatpush.bf16.msra.mxu0 %v840
    %1152 = vmatpush.bf16.msra.mxu0 %v835
    %1153 = vmatpush.bf16.msra.mxu0 %v830
    %1154 = vmatmul.bf16.gmra.mxu0 %v285
    %v1155 = vpop.f32.mrf.mxu0
    %v1156 = vadd.f32 %v436, %v1155
    %v1157 = vpop.f32.mrf.mxu0
    %1158 = vdwg.mxu0
    %1159 = vmatpush.bf16.msra.mxu0 %v905
    %1160 = vmatpush.bf16.msra.mxu0 %v900
    %1161 = vmatpush.bf16.msra.mxu0 %v895
    %1162 = vmatpush.bf16.msra.mxu0 %v890
    %1163 = vmatpush.bf16.msra.mxu0 %v885
    %1164 = vmatpush.bf16.msra.mxu0 %v880
    %1165 = vmatpush.bf16.msra.mxu0 %v875
    %1166 = vmatpush.bf16.msra.mxu0 %v870
    %1167 = vmatmul.bf16.gmra.mxu0 %v286
    %v1168 = vpop.f32.mrf.mxu0
    %v1169 = vadd.f32 %v1156, %v1168
    %v1170 = vpop.f32.mrf.mxu0
    %1171 = vdwg.mxu0
    %1172 = vmatpush.bf16.msra.mxu0 %v945
    %1173 = vmatpush.bf16.msra.mxu0 %v940
    %1174 = vmatpush.bf16.msra.mxu0 %v935
    %1175 = vmatpush.bf16.msra.mxu0 %v930
    %1176 = vmatpush.bf16.msra.mxu0 %v925
    %1177 = vmatpush.bf16.msra.mxu0 %v920
    %1178 = vmatpush.bf16.msra.mxu0 %v915
    %1179 = vmatpush.bf16.msra.mxu0 %v910
    %1180 = vmatmul.bf16.gmra.mxu0 %v287
    %v1181 = vpop.f32.mrf.mxu0
    %v1182 = vadd.f32 %v1169, %v1181
    %v1183 = vpop.f32.mrf.mxu0
    %1184 = vdwg.mxu0
    %1185 = vmatpush.bf16.msra.mxu0 %v866
    %1186 = vmatpush.bf16.msra.mxu0 %v861
    %1187 = vmatpush.bf16.msra.mxu0 %v856
    %1188 = vmatpush.bf16.msra.mxu0 %v851
    %1189 = vmatpush.bf16.msra.mxu0 %v846
    %1190 = vmatpush.bf16.msra.mxu0 %v841
    %1191 = vmatpush.bf16.msra.mxu0 %v836
    %1192 = vmatpush.bf16.msra.mxu0 %v831
    %1193 = vmatmul.bf16.gmra.mxu0 %v285
    %v1194 = vpop.f32.mrf.mxu0
    %v1195 = vadd.f32 %v437, %v1194
    %v1196 = vpop.f32.mrf.mxu0
    %1197 = vdwg.mxu0
    %1198 = vmatpush.bf16.msra.mxu0 %v906
    %1199 = vmatpush.bf16.msra.mxu0 %v901
    %1200 = vmatpush.bf16.msra.mxu0 %v896
    %1201 = vmatpush.bf16.msra.mxu0 %v891
    %1202 = vmatpush.bf16.msra.mxu0 %v886
    %1203 = vmatpush.bf16.msra.mxu0 %v881
    %1204 = vmatpush.bf16.msra.mxu0 %v876
    %1205 = vmatpush.bf16.msra.mxu0 %v871
    %1206 = vmatmul.bf16.gmra.mxu0 %v286
    %v1207 = vpop.f32.mrf.mxu0
    %v1208 = vadd.f32 %v1195, %v1207
    %v1209 = vpop.f32.mrf.mxu0
    %1210 = vdwg.mxu0
    %1211 = vmatpush.bf16.msra.mxu0 %v946
    %1212 = vmatpush.bf16.msra.mxu0 %v941
    %1213 = vmatpush.bf16.msra.mxu0 %v936
    %1214 = vmatpush.bf16.msra.mxu0 %v931
    %1215 = vmatpush.bf16.msra.mxu0 %v926
    %1216 = vmatpush.bf16.msra.mxu0 %v921
    %1217 = vmatpush.bf16.msra.mxu0 %v916
    %1218 = vmatpush.bf16.msra.mxu0 %v911
    %1219 = vmatmul.bf16.gmra.mxu0 %v287
    %v1220 = vpop.f32.mrf.mxu0
    %v1221 = vadd.f32 %v1208, %v1220
    %v1222 = vpop.f32.mrf.mxu0
    %1223 = vdwg.mxu0
    %1224 = vmatpush.bf16.msra.mxu0 %v867
    %1225 = vmatpush.bf16.msra.mxu0 %v862
    %1226 = vmatpush.bf16.msra.mxu0 %v857
    %1227 = vmatpush.bf16.msra.mxu0 %v852
    %1228 = vmatpush.bf16.msra.mxu0 %v847
    %1229 = vmatpush.bf16.msra.mxu0 %v842
    %1230 = vmatpush.bf16.msra.mxu0 %v837
    %1231 = vmatpush.bf16.msra.mxu0 %v832
    %1232 = vmatmul.bf16.gmra.mxu0 %v285
    %v1233 = vpop.f32.mrf.mxu0
    %v1234 = vadd.f32 %v438, %v1233
    %v1235 = vpop.f32.mrf.mxu0
    %1236 = vdwg.mxu0
    %1237 = vmatpush.bf16.msra.mxu0 %v907
    %1238 = vmatpush.bf16.msra.mxu0 %v902
    %1239 = vmatpush.bf16.msra.mxu0 %v897
    %1240 = vmatpush.bf16.msra.mxu0 %v892
    %1241 = vmatpush.bf16.msra.mxu0 %v887
    %1242 = vmatpush.bf16.msra.mxu0 %v882
    %1243 = vmatpush.bf16.msra.mxu0 %v877
    %1244 = vmatpush.bf16.msra.mxu0 %v872
    %1245 = vmatmul.bf16.gmra.mxu0 %v286
    %v1246 = vpop.f32.mrf.mxu0
    %v1247 = vadd.f32 %v1234, %v1246
    %v1248 = vpop.f32.mrf.mxu0
    %1249 = vdwg.mxu0
    %1250 = vmatpush.bf16.msra.mxu0 %v947
    %1251 = vmatpush.bf16.msra.mxu0 %v942
    %1252 = vmatpush.bf16.msra.mxu0 %v937
    %1253 = vmatpush.bf16.msra.mxu0 %v932
    %1254 = vmatpush.bf16.msra.mxu0 %v927
    %1255 = vmatpush.bf16.msra.mxu0 %v922
    %1256 = vmatpush.bf16.msra.mxu0 %v917
    %1257 = vmatpush.bf16.msra.mxu0 %v912
    %1258 = vmatmul.bf16.gmra.mxu0 %v287
    %v1259 = vpop.f32.mrf.mxu0
    %v1260 = vadd.f32 %v1247, %v1259
    %v1261 = vpop.f32.mrf.mxu0
    %1262 = vdwg.mxu0
    %v1263 = vadd.f32 %v1104, %v230
    %v1264 = vadd.f32 %v1143, %v243
    %v1265 = vadd.f32 %v1182, %v256
    %v1266 = vadd.f32 %v1221, %v269
    %v1267 = vadd.f32 %v1260, %v282
    %v1268 = vpack.c.bf16 %v1263, %v1263
    %v1269 = vpack.c.bf16 %v1264, %v1264
    %v1270 = vpack.c.bf16 %v1265, %v1265
    %v1271 = vpack.c.bf16 %v1266, %v1266
    %v1272 = vpack.c.bf16 %v1267, %v1267
    %v1273 = vld [vmem:[#allocation4] sm:$0xff]
    %v1274 = vld [vmem:[#allocation4 + $0x8] sm:$0xff]
    %v1275 = vld [vmem:[#allocation4 + $0x10] sm:$0xf]
    %v1276 = vld [vmem:[#allocation4 + $0x14] sm:$0xff]
    %v1277 = vld [vmem:[#allocation4 + $0x1c] sm:$0xff]
    %v1278 = vld [vmem:[#allocation4 + $0x24] sm:$0xf]
    %v1279 = vld [vmem:[#allocation4 + $0x28] sm:$0xff]
    %v1280 = vld [vmem:[#allocation4 + $0x30] sm:$0xff]
    %v1281 = vld [vmem:[#allocation4 + $0x38] sm:$0xf]
    %v1282 = vld [vmem:[#allocation4 + $0x3c] sm:$0xff]
    %v1283 = vld [vmem:[#allocation4 + $0x44] sm:$0xff]
    %v1284 = vld [vmem:[#allocation4 + $0x4c] sm:$0xf]
    %v1285 = vld [vmem:[#allocation4 + $0x50] sm:$0xff]
    %v1286 = vld [vmem:[#allocation4 + $0x58] sm:$0xff]
    %v1287 = vld [vmem:[#allocation4 + $0x60] sm:$0xf]
    %v1288 = vld [vmem:[#allocation4 + $0x64] sm:$0xff]
    %v1289 = vld [vmem:[#allocation4 + $0x6c] sm:$0xff]
    %v1290 = vld [vmem:[#allocation4 + $0x74] sm:$0xf]
    %v1291 = vld [vmem:[#allocation4 + $0x78] sm:$0xff]
    %v1292 = vld [vmem:[#allocation4 + $0x80] sm:$0xff]
    %v1293 = vld [vmem:[#allocation4 + $0x88] sm:$0xf]
    %v1294 = vld [vmem:[#allocation4 + $0x8c] sm:$0xff]
    %v1295 = vld [vmem:[#allocation4 + $0x94] sm:$0xff]
    %v1296 = vld [vmem:[#allocation4 + $0x9c] sm:$0xf]
    %v1297 = vld [vmem:[#allocation4 + $0xa0] sm:$0xff]
    %v1298 = vld [vmem:[#allocation4 + $0xa8] sm:$0xff]
    %v1299 = vld [vmem:[#allocation4 + $0xb0] sm:$0xf]
    %v1300 = vld [vmem:[#allocation4 + $0xb4] sm:$0xff]
    %v1301 = vld [vmem:[#allocation4 + $0xbc] sm:$0xff]
    %v1302 = vld [vmem:[#allocation4 + $0xc4] sm:$0xf]
    %v1303 = vld [vmem:[#allocation4 + $0xc8] sm:$0xff]
    %v1304 = vld [vmem:[#allocation4 + $0xd0] sm:$0xff]
    %v1305 = vld [vmem:[#allocation4 + $0xd8] sm:$0xf]
    %v1306 = vld [vmem:[#allocation4 + $0xdc] sm:$0xff]
    %v1307 = vld [vmem:[#allocation4 + $0xe4] sm:$0xff]
    %v1308 = vld [vmem:[#allocation4 + $0xec] sm:$0xf]
    %v1309 = vld [vmem:[#allocation4 + $0xf0] sm:$0xff]
    %v1310 = vld [vmem:[#allocation4 + $0xf8] sm:$0xff]
    %v1311 = vld [vmem:[#allocation4 + $0x100] sm:$0xf]
    %v1312 = vld [vmem:[#allocation4 + $0x104] sm:$0xff]
    %v1313 = vld [vmem:[#allocation4 + $0x10c] sm:$0xff]
    %v1314 = vld [vmem:[#allocation4 + $0x114] sm:$0xf]
    %v1315 = vld [vmem:[#allocation4 + $0x118] sm:$0xff]
    %v1316 = vld [vmem:[#allocation4 + $0x120] sm:$0xff]
    %v1317 = vld [vmem:[#allocation4 + $0x128] sm:$0xf]
    %v1318 = vld [vmem:[#allocation4 + $0x12c] sm:$0xff]
    %v1319 = vld [vmem:[#allocation4 + $0x134] sm:$0xff]
    %v1320 = vld [vmem:[#allocation4 + $0x13c] sm:$0xf]
    %v1321 = vld [vmem:[#allocation4 + $0x140] sm:$0xff]
    %v1322 = vld [vmem:[#allocation4 + $0x148] sm:$0xff]
    %v1323 = vld [vmem:[#allocation4 + $0x150] sm:$0xf]
    %v1324 = vld [vmem:[#allocation4 + $0x154] sm:$0xff]
    %v1325 = vld [vmem:[#allocation4 + $0x15c] sm:$0xff]
    %v1326 = vld [vmem:[#allocation4 + $0x164] sm:$0xf]
    %v1327 = vld [vmem:[#allocation4 + $0x168] sm:$0xff]
    %v1328 = vld [vmem:[#allocation4 + $0x170] sm:$0xff]
    %v1329 = vld [vmem:[#allocation4 + $0x178] sm:$0xf]
    %v1330 = vld [vmem:[#allocation4 + $0x17c] sm:$0xff]
    %v1331 = vld [vmem:[#allocation4 + $0x184] sm:$0xff]
    %v1332 = vld [vmem:[#allocation4 + $0x18c] sm:$0xf]
    %v1333 = vld [vmem:[#allocation4 + $0x190] sm:$0xff]
    %v1334 = vld [vmem:[#allocation4 + $0x198] sm:$0xff]
    %v1335 = vld [vmem:[#allocation4 + $0x1a0] sm:$0xf]
    %v1336 = vld [vmem:[#allocation4 + $0x1a4] sm:$0xff]
    %v1337 = vld [vmem:[#allocation4 + $0x1ac] sm:$0xff]
    %v1338 = vld [vmem:[#allocation4 + $0x1b4] sm:$0xf]
    %v1339 = vld [vmem:[#allocation4 + $0x1b8] sm:$0xff]
    %v1340 = vld [vmem:[#allocation4 + $0x1c0] sm:$0xff]
    %v1341 = vld [vmem:[#allocation4 + $0x1c8] sm:$0xf]
    %v1342 = vld [vmem:[#allocation4 + $0x1cc] sm:$0xff]
    %v1343 = vld [vmem:[#allocation4 + $0x1d4] sm:$0xff]
    %v1344 = vld [vmem:[#allocation4 + $0x1dc] sm:$0xf]
    %v1345 = vld [vmem:[#allocation4 + $0x1e0] sm:$0xff]
    %v1346 = vld [vmem:[#allocation4 + $0x1e8] sm:$0xff]
    %v1347 = vld [vmem:[#allocation4 + $0x1f0] sm:$0xf]
    %v1348 = vld [vmem:[#allocation4 + $0x1f4] sm:$0xff]
    %v1349 = vld [vmem:[#allocation4 + $0x1fc] sm:$0xff]
    %v1350 = vld [vmem:[#allocation4 + $0x204] sm:$0xf]
    %v1351 = vld [vmem:[#allocation4 + $0x208] sm:$0xff]
    %v1352 = vld [vmem:[#allocation4 + $0x210] sm:$0xff]
    %v1353 = vld [vmem:[#allocation4 + $0x218] sm:$0xf]
    %v1354 = vld [vmem:[#allocation4 + $0x21c] sm:$0xff]
    %v1355 = vld [vmem:[#allocation4 + $0x224] sm:$0xff]
    %v1356 = vld [vmem:[#allocation4 + $0x22c] sm:$0xf]
    %v1357 = vld [vmem:[#allocation4 + $0x230] sm:$0xff]
    %v1358 = vld [vmem:[#allocation4 + $0x238] sm:$0xff]
    %v1359 = vld [vmem:[#allocation4 + $0x240] sm:$0xf]
    %v1360 = vld [vmem:[#allocation4 + $0x244] sm:$0xff]
    %v1361 = vld [vmem:[#allocation4 + $0x24c] sm:$0xff]
    %v1362 = vld [vmem:[#allocation4 + $0x254] sm:$0xf]
    %v1363 = vld [vmem:[#allocation4 + $0x258] sm:$0xff]
    %v1364 = vld [vmem:[#allocation4 + $0x260] sm:$0xff]
    %v1365 = vld [vmem:[#allocation4 + $0x268] sm:$0xf]
    %v1366 = vld [vmem:[#allocation4 + $0x26c] sm:$0xff]
    %v1367 = vld [vmem:[#allocation4 + $0x274] sm:$0xff]
    %v1368 = vld [vmem:[#allocation4 + $0x27c] sm:$0xf]
    %v1369 = vld [vmem:[#allocation4 + $0x280] sm:$0xff]
    %v1370 = vld [vmem:[#allocation4 + $0x288] sm:$0xff]
    %v1371 = vld [vmem:[#allocation4 + $0x290] sm:$0xf]
    %v1372 = vld [vmem:[#allocation4 + $0x294] sm:$0xff]
    %v1373 = vld [vmem:[#allocation4 + $0x29c] sm:$0xff]
    %v1374 = vld [vmem:[#allocation4 + $0x2a4] sm:$0xf]
    %v1375 = vld [vmem:[#allocation4 + $0x2a8] sm:$0xff]
    %v1376 = vld [vmem:[#allocation4 + $0x2b0] sm:$0xff]
    %v1377 = vld [vmem:[#allocation4 + $0x2b8] sm:$0xf]
    %v1378 = vld [vmem:[#allocation4 + $0x2bc] sm:$0xff]
    %v1379 = vld [vmem:[#allocation4 + $0x2c4] sm:$0xff]
    %v1380 = vld [vmem:[#allocation4 + $0x2cc] sm:$0xf]
    %v1381 = vld [vmem:[#allocation4 + $0x2d0] sm:$0xff]
    %v1382 = vld [vmem:[#allocation4 + $0x2d8] sm:$0xff]
    %v1383 = vld [vmem:[#allocation4 + $0x2e0] sm:$0xf]
    %v1384 = vld [vmem:[#allocation4 + $0x2e4] sm:$0xff]
    %v1385 = vld [vmem:[#allocation4 + $0x2ec] sm:$0xff]
    %v1386 = vld [vmem:[#allocation4 + $0x2f4] sm:$0xf]
    %v1387 = vld [vmem:[#allocation4 + $0x2f8] sm:$0xff]
    %v1388 = vld [vmem:[#allocation4 + $0x300] sm:$0xff]
    %v1389 = vld [vmem:[#allocation4 + $0x308] sm:$0xf]
    %v1390 = vld [vmem:[#allocation4 + $0x30c] sm:$0xff]
    %v1391 = vld [vmem:[#allocation4 + $0x314] sm:$0xff]
    %v1392 = vld [vmem:[#allocation4 + $0x31c] sm:$0xf]
    %v1393 = vld [vmem:[#allocation4 + $0x320] sm:$0xff]
    %v1394 = vld [vmem:[#allocation4 + $0x328] sm:$0xff]
    %v1395 = vld [vmem:[#allocation4 + $0x330] sm:$0xf]
    %v1396 = vld [vmem:[#allocation4 + $0x334] sm:$0xff]
    %v1397 = vld [vmem:[#allocation4 + $0x33c] sm:$0xff]
    %v1398 = vld [vmem:[#allocation4 + $0x344] sm:$0xf]
    %v1399 = vld [vmem:[#allocation4 + $0x348] sm:$0xff]
    %v1400 = vld [vmem:[#allocation4 + $0x350] sm:$0xff]
    %v1401 = vld [vmem:[#allocation4 + $0x358] sm:$0xf]
    %v1402 = vld [vmem:[#allocation4 + $0x35c] sm:$0xff]
    %v1403 = vld [vmem:[#allocation4 + $0x364] sm:$0xff]
    %v1404 = vld [vmem:[#allocation4 + $0x36c] sm:$0xf]
    %v1405 = vld [vmem:[#allocation4 + $0x370] sm:$0xff]
    %v1406 = vld [vmem:[#allocation4 + $0x378] sm:$0xff]
    %v1407 = vld [vmem:[#allocation4 + $0x380] sm:$0xf]
    %v1408 = vld [vmem:[#allocation4 + $0x384] sm:$0xff]
    %v1409 = vld [vmem:[#allocation4 + $0x38c] sm:$0xff]
    %v1410 = vld [vmem:[#allocation4 + $0x394] sm:$0xf]
    %v1411 = vld [vmem:[#allocation4 + $0x398] sm:$0xff]
    %v1412 = vld [vmem:[#allocation4 + $0x3a0] sm:$0xff]
    %v1413 = vld [vmem:[#allocation4 + $0x3a8] sm:$0xf]
    %v1414 = vld [vmem:[#allocation4 + $0x3ac] sm:$0xff]
    %v1415 = vld [vmem:[#allocation4 + $0x3b4] sm:$0xff]
    %v1416 = vld [vmem:[#allocation4 + $0x3bc] sm:$0xf]
    %v1417 = vld [vmem:[#allocation4 + $0x3c0] sm:$0xff]
    %v1418 = vld [vmem:[#allocation4 + $0x3c8] sm:$0xff]
    %v1419 = vld [vmem:[#allocation4 + $0x3d0] sm:$0xf]
    %v1420 = vld [vmem:[#allocation4 + $0x3d4] sm:$0xff]
    %v1421 = vld [vmem:[#allocation4 + $0x3dc] sm:$0xff]
    %v1422 = vld [vmem:[#allocation4 + $0x3e4] sm:$0xf]
    %v1423 = vld [vmem:[#allocation4 + $0x3e8] sm:$0xff]
    %v1424 = vld [vmem:[#allocation4 + $0x3f0] sm:$0xff]
    %v1425 = vld [vmem:[#allocation4 + $0x3f8] sm:$0xf]
    %v1426 = vld [vmem:[#allocation4 + $0x3fc] sm:$0xff]
    %v1427 = vld [vmem:[#allocation4 + $0x404] sm:$0xff]
    %v1428 = vld [vmem:[#allocation4 + $0x40c] sm:$0xf]
    %v1429 = vld [vmem:[#allocation4 + $0x410] sm:$0xff]
    %v1430 = vld [vmem:[#allocation4 + $0x418] sm:$0xff]
    %v1431 = vld [vmem:[#allocation4 + $0x420] sm:$0xf]
    %v1432 = vld [vmem:[#allocation4 + $0x424] sm:$0xff]
    %v1433 = vld [vmem:[#allocation4 + $0x42c] sm:$0xff]
    %v1434 = vld [vmem:[#allocation4 + $0x434] sm:$0xf]
    %v1435 = vld [vmem:[#allocation4 + $0x438] sm:$0xff]
    %v1436 = vld [vmem:[#allocation4 + $0x440] sm:$0xff]
    %v1437 = vld [vmem:[#allocation4 + $0x448] sm:$0xf]
    %v1438 = vld [vmem:[#allocation4 + $0x44c] sm:$0xff]
    %v1439 = vld [vmem:[#allocation4 + $0x454] sm:$0xff]
    %v1440 = vld [vmem:[#allocation4 + $0x45c] sm:$0xf]
    %v1441 = vld [vmem:[#allocation4 + $0x460] sm:$0xff]
    %v1442 = vld [vmem:[#allocation4 + $0x468] sm:$0xff]
    %v1443 = vld [vmem:[#allocation4 + $0x470] sm:$0xf]
    %v1444 = vld [vmem:[#allocation4 + $0x474] sm:$0xff]
    %v1445 = vld [vmem:[#allocation4 + $0x47c] sm:$0xff]
    %v1446 = vld [vmem:[#allocation4 + $0x484] sm:$0xf]
    %v1447 = vld [vmem:[#allocation4 + $0x488] sm:$0xff]
    %v1448 = vld [vmem:[#allocation4 + $0x490] sm:$0xff]
    %v1449 = vld [vmem:[#allocation4 + $0x498] sm:$0xf]
    %v1450 = vld [vmem:[#allocation4 + $0x49c] sm:$0xff]
    %v1451 = vld [vmem:[#allocation4 + $0x4a4] sm:$0xff]
    %v1452 = vld [vmem:[#allocation4 + $0x4ac] sm:$0xf]
    %v1453 = vld [vmem:[#allocation4 + $0x4b0] sm:$0xff]
    %v1454 = vld [vmem:[#allocation4 + $0x4b8] sm:$0xff]
    %v1455 = vld [vmem:[#allocation4 + $0x4c0] sm:$0xf]
    %v1456 = vld [vmem:[#allocation4 + $0x4c4] sm:$0xff]
    %v1457 = vld [vmem:[#allocation4 + $0x4cc] sm:$0xff]
    %v1458 = vld [vmem:[#allocation4 + $0x4d4] sm:$0xf]
    %v1459 = vld [vmem:[#allocation4 + $0x4d8] sm:$0xff]
    %v1460 = vld [vmem:[#allocation4 + $0x4e0] sm:$0xff]
    %v1461 = vld [vmem:[#allocation4 + $0x4e8] sm:$0xf]
    %v1462 = vld [vmem:[#allocation4 + $0x4ec] sm:$0xff]
    %v1463 = vld [vmem:[#allocation4 + $0x4f4] sm:$0xff]
    %v1464 = vld [vmem:[#allocation4 + $0x4fc] sm:$0xf]
    %v1465 = vld [vmem:[#allocation4 + $0x500] sm:$0xff]
    %v1466 = vld [vmem:[#allocation4 + $0x508] sm:$0xff]
    %v1467 = vld [vmem:[#allocation4 + $0x510] sm:$0xf]
    %v1468 = vld [vmem:[#allocation4 + $0x514] sm:$0xff]
    %v1469 = vld [vmem:[#allocation4 + $0x51c] sm:$0xff]
    %v1470 = vld [vmem:[#allocation4 + $0x524] sm:$0xf]
    %v1471 = vld [vmem:[#allocation4 + $0x528] sm:$0xff]
    %v1472 = vld [vmem:[#allocation4 + $0x530] sm:$0xff]
    %v1473 = vld [vmem:[#allocation4 + $0x538] sm:$0xf]
    %v1474 = vld [vmem:[#allocation4 + $0x53c] sm:$0xff]
    %v1475 = vld [vmem:[#allocation4 + $0x544] sm:$0xff]
    %v1476 = vld [vmem:[#allocation4 + $0x54c] sm:$0xf]
    %v1477 = vld [vmem:[#allocation4 + $0x550] sm:$0xff]
    %v1478 = vld [vmem:[#allocation4 + $0x558] sm:$0xff]
    %v1479 = vld [vmem:[#allocation4 + $0x560] sm:$0xf]
    %v1480 = vld [vmem:[#allocation4 + $0x564] sm:$0xff]
    %v1481 = vld [vmem:[#allocation4 + $0x56c] sm:$0xff]
    %v1482 = vld [vmem:[#allocation4 + $0x574] sm:$0xf]
    %v1483 = vld [vmem:[#allocation4 + $0x578] sm:$0xff]
    %v1484 = vld [vmem:[#allocation4 + $0x580] sm:$0xff]
    %v1485 = vld [vmem:[#allocation4 + $0x588] sm:$0xf]
    %v1486 = vld [vmem:[#allocation4 + $0x58c] sm:$0xff]
    %v1487 = vld [vmem:[#allocation4 + $0x594] sm:$0xff]
    %v1488 = vld [vmem:[#allocation4 + $0x59c] sm:$0xf]
    %v1489 = vld [vmem:[#allocation4 + $0x5a0] sm:$0xff]
    %v1490 = vld [vmem:[#allocation4 + $0x5a8] sm:$0xff]
    %v1491 = vld [vmem:[#allocation4 + $0x5b0] sm:$0xf]
    %v1492 = vld [vmem:[#allocation4 + $0x5b4] sm:$0xff]
    %v1493 = vld [vmem:[#allocation4 + $0x5bc] sm:$0xff]
    %v1494 = vld [vmem:[#allocation4 + $0x5c4] sm:$0xf]
    %v1495 = vld [vmem:[#allocation4 + $0x5c8] sm:$0xff]
    %v1496 = vld [vmem:[#allocation4 + $0x5d0] sm:$0xff]
    %v1497 = vld [vmem:[#allocation4 + $0x5d8] sm:$0xf]
    %v1498 = vld [vmem:[#allocation4 + $0x5dc] sm:$0xff]
    %v1499 = vld [vmem:[#allocation4 + $0x5e4] sm:$0xff]
    %v1500 = vld [vmem:[#allocation4 + $0x5ec] sm:$0xf]
    %v1501 = vld [vmem:[#allocation4 + $0x5f0] sm:$0xff]
    %v1502 = vld [vmem:[#allocation4 + $0x5f8] sm:$0xff]
    %v1503 = vld [vmem:[#allocation4 + $0x600] sm:$0xf]
    %v1504 = vld [vmem:[#allocation4 + $0x604] sm:$0xff]
    %v1505 = vld [vmem:[#allocation4 + $0x60c] sm:$0xff]
    %v1506 = vld [vmem:[#allocation4 + $0x614] sm:$0xf]
    %v1507 = vld [vmem:[#allocation4 + $0x618] sm:$0xff]
    %v1508 = vld [vmem:[#allocation4 + $0x620] sm:$0xff]
    %v1509 = vld [vmem:[#allocation4 + $0x628] sm:$0xf]
    %v1510 = vld [vmem:[#allocation4 + $0x62c] sm:$0xff]
    %v1511 = vld [vmem:[#allocation4 + $0x634] sm:$0xff]
    %v1512 = vld [vmem:[#allocation4 + $0x63c] sm:$0xf]
    %v1513 = vld [vmem:[%s9] sm:$0x1f]
    %v1515 = vperm.slane %v1513, 0
    %v1516 = vperm.slane %v1513, 1
    %v1517 = vperm.slane %v1513, 2
    %v1518 = vperm.slane %v1513, 3
    %v1519 = vperm.slane %v1513, 4
    %v1765 = vunpack.c.l.b16 %v1273
    %v1766 = vunpack.c.h.b16 %v1273
    %v1767 = vunpack.c.l.b16 %v1274
    %v1768 = vunpack.c.h.b16 %v1274
    %v1769 = vunpack.c.l.b16 %v1275
    %v1770 = vunpack.c.l.b16 %v1276
    %v1771 = vunpack.c.h.b16 %v1276
    %v1772 = vunpack.c.l.b16 %v1277
    %v1773 = vunpack.c.h.b16 %v1277
    %v1774 = vunpack.c.l.b16 %v1278
    %v1775 = vunpack.c.l.b16 %v1279
    %v1776 = vunpack.c.h.b16 %v1279
    %v1777 = vunpack.c.l.b16 %v1280
    %v1778 = vunpack.c.h.b16 %v1280
    %v1779 = vunpack.c.l.b16 %v1281
    %v1780 = vunpack.c.l.b16 %v1282
    %v1781 = vunpack.c.h.b16 %v1282
    %v1782 = vunpack.c.l.b16 %v1283
    %v1783 = vunpack.c.h.b16 %v1283
    %v1784 = vunpack.c.l.b16 %v1284
    %v1785 = vunpack.c.l.b16 %v1285
    %v1786 = vunpack.c.h.b16 %v1285
    %v1787 = vunpack.c.l.b16 %v1286
    %v1788 = vunpack.c.h.b16 %v1286
    %v1789 = vunpack.c.l.b16 %v1287
    %v1790 = vunpack.c.l.b16 %v1288
    %v1791 = vunpack.c.h.b16 %v1288
    %v1792 = vunpack.c.l.b16 %v1289
    %v1793 = vunpack.c.h.b16 %v1289
    %v1794 = vunpack.c.l.b16 %v1290
    %v1795 = vunpack.c.l.b16 %v1291
    %v1796 = vunpack.c.h.b16 %v1291
    %v1797 = vunpack.c.l.b16 %v1292
    %v1798 = vunpack.c.h.b16 %v1292
    %v1799 = vunpack.c.l.b16 %v1293
    %v1800 = vunpack.c.l.b16 %v1294
    %v1801 = vunpack.c.h.b16 %v1294
    %v1802 = vunpack.c.l.b16 %v1295
    %v1803 = vunpack.c.h.b16 %v1295
    %v1804 = vunpack.c.l.b16 %v1296
    %v1805 = vunpack.c.l.b16 %v1297
    %v1806 = vunpack.c.h.b16 %v1297
    %v1807 = vunpack.c.l.b16 %v1298
    %v1808 = vunpack.c.h.b16 %v1298
    %v1809 = vunpack.c.l.b16 %v1299
    %v1810 = vunpack.c.l.b16 %v1300
    %v1811 = vunpack.c.h.b16 %v1300
    %v1812 = vunpack.c.l.b16 %v1301
    %v1813 = vunpack.c.h.b16 %v1301
    %v1814 = vunpack.c.l.b16 %v1302
    %v1815 = vunpack.c.l.b16 %v1303
    %v1816 = vunpack.c.h.b16 %v1303
    %v1817 = vunpack.c.l.b16 %v1304
    %v1818 = vunpack.c.h.b16 %v1304
    %v1819 = vunpack.c.l.b16 %v1305
    %v1820 = vunpack.c.l.b16 %v1306
    %v1821 = vunpack.c.h.b16 %v1306
    %v1822 = vunpack.c.l.b16 %v1307
    %v1823 = vunpack.c.h.b16 %v1307
    %v1824 = vunpack.c.l.b16 %v1308
    %v1825 = vunpack.c.l.b16 %v1309
    %v1826 = vunpack.c.h.b16 %v1309
    %v1827 = vunpack.c.l.b16 %v1310
    %v1828 = vunpack.c.h.b16 %v1310
    %v1829 = vunpack.c.l.b16 %v1311
    %v1830 = vunpack.c.l.b16 %v1312
    %v1831 = vunpack.c.h.b16 %v1312
    %v1832 = vunpack.c.l.b16 %v1313
    %v1833 = vunpack.c.h.b16 %v1313
    %v1834 = vunpack.c.l.b16 %v1314
    %v1835 = vunpack.c.l.b16 %v1315
    %v1836 = vunpack.c.h.b16 %v1315
    %v1837 = vunpack.c.l.b16 %v1316
    %v1838 = vunpack.c.h.b16 %v1316
    %v1839 = vunpack.c.l.b16 %v1317
    %v1840 = vunpack.c.l.b16 %v1318
    %v1841 = vunpack.c.h.b16 %v1318
    %v1842 = vunpack.c.l.b16 %v1319
    %v1843 = vunpack.c.h.b16 %v1319
    %v1844 = vunpack.c.l.b16 %v1320
    %v1845 = vunpack.c.l.b16 %v1321
    %v1846 = vunpack.c.h.b16 %v1321
    %v1847 = vunpack.c.l.b16 %v1322
    %v1848 = vunpack.c.h.b16 %v1322
    %v1849 = vunpack.c.l.b16 %v1323
    %v1850 = vunpack.c.l.b16 %v1324
    %v1851 = vunpack.c.h.b16 %v1324
    %v1852 = vunpack.c.l.b16 %v1325
    %v1853 = vunpack.c.h.b16 %v1325
    %v1854 = vunpack.c.l.b16 %v1326
    %v1855 = vunpack.c.l.b16 %v1327
    %v1856 = vunpack.c.h.b16 %v1327
    %v1857 = vunpack.c.l.b16 %v1328
    %v1858 = vunpack.c.h.b16 %v1328
    %v1859 = vunpack.c.l.b16 %v1329
    %v1860 = vunpack.c.l.b16 %v1330
    %v1861 = vunpack.c.h.b16 %v1330
    %v1862 = vunpack.c.l.b16 %v1331
    %v1863 = vunpack.c.h.b16 %v1331
    %v1864 = vunpack.c.l.b16 %v1332
    %v1865 = vunpack.c.l.b16 %v1333
    %v1866 = vunpack.c.h.b16 %v1333
    %v1867 = vunpack.c.l.b16 %v1334
    %v1868 = vunpack.c.h.b16 %v1334
    %v1869 = vunpack.c.l.b16 %v1335
    %v1870 = vunpack.c.l.b16 %v1336
    %v1871 = vunpack.c.h.b16 %v1336
    %v1872 = vunpack.c.l.b16 %v1337
    %v1873 = vunpack.c.h.b16 %v1337
    %v1874 = vunpack.c.l.b16 %v1338
    %v1875 = vunpack.c.l.b16 %v1339
    %v1876 = vunpack.c.h.b16 %v1339
    %v1877 = vunpack.c.l.b16 %v1340
    %v1878 = vunpack.c.h.b16 %v1340
    %v1879 = vunpack.c.l.b16 %v1341
    %v1880 = vunpack.c.l.b16 %v1342
    %v1881 = vunpack.c.h.b16 %v1342
    %v1882 = vunpack.c.l.b16 %v1343
    %v1883 = vunpack.c.h.b16 %v1343
    %v1884 = vunpack.c.l.b16 %v1344
    %v1885 = vunpack.c.l.b16 %v1345
    %v1886 = vunpack.c.h.b16 %v1345
    %v1887 = vunpack.c.l.b16 %v1346
    %v1888 = vunpack.c.h.b16 %v1346
    %v1889 = vunpack.c.l.b16 %v1347
    %v1890 = vunpack.c.l.b16 %v1348
    %v1891 = vunpack.c.h.b16 %v1348
    %v1892 = vunpack.c.l.b16 %v1349
    %v1893 = vunpack.c.h.b16 %v1349
    %v1894 = vunpack.c.l.b16 %v1350
    %v1895 = vunpack.c.l.b16 %v1351
    %v1896 = vunpack.c.h.b16 %v1351
    %v1897 = vunpack.c.l.b16 %v1352
    %v1898 = vunpack.c.h.b16 %v1352
    %v1899 = vunpack.c.l.b16 %v1353
    %v1900 = vunpack.c.l.b16 %v1354
    %v1901 = vunpack.c.h.b16 %v1354
    %v1902 = vunpack.c.l.b16 %v1355
    %v1903 = vunpack.c.h.b16 %v1355
    %v1904 = vunpack.c.l.b16 %v1356
    %v1905 = vunpack.c.l.b16 %v1357
    %v1906 = vunpack.c.h.b16 %v1357
    %v1907 = vunpack.c.l.b16 %v1358
    %v1908 = vunpack.c.h.b16 %v1358
    %v1909 = vunpack.c.l.b16 %v1359
    %v1910 = vunpack.c.l.b16 %v1360
    %v1911 = vunpack.c.h.b16 %v1360
    %v1912 = vunpack.c.l.b16 %v1361
    %v1913 = vunpack.c.h.b16 %v1361
    %v1914 = vunpack.c.l.b16 %v1362
    %v1915 = vunpack.c.l.b16 %v1363
    %v1916 = vunpack.c.h.b16 %v1363
    %v1917 = vunpack.c.l.b16 %v1364
    %v1918 = vunpack.c.h.b16 %v1364
    %v1919 = vunpack.c.l.b16 %v1365
    %v1920 = vunpack.c.l.b16 %v1366
    %v1921 = vunpack.c.h.b16 %v1366
    %v1922 = vunpack.c.l.b16 %v1367
    %v1923 = vunpack.c.h.b16 %v1367
    %v1924 = vunpack.c.l.b16 %v1368
    %v1925 = vunpack.c.l.b16 %v1369
    %v1926 = vunpack.c.h.b16 %v1369
    %v1927 = vunpack.c.l.b16 %v1370
    %v1928 = vunpack.c.h.b16 %v1370
    %v1929 = vunpack.c.l.b16 %v1371
    %v1930 = vunpack.c.l.b16 %v1372
    %v1931 = vunpack.c.h.b16 %v1372
    %v1932 = vunpack.c.l.b16 %v1373
    %v1933 = vunpack.c.h.b16 %v1373
    %v1934 = vunpack.c.l.b16 %v1374
    %v1935 = vunpack.c.l.b16 %v1375
    %v1936 = vunpack.c.h.b16 %v1375
    %v1937 = vunpack.c.l.b16 %v1376
    %v1938 = vunpack.c.h.b16 %v1376
    %v1939 = vunpack.c.l.b16 %v1377
    %v1940 = vunpack.c.l.b16 %v1378
    %v1941 = vunpack.c.h.b16 %v1378
    %v1942 = vunpack.c.l.b16 %v1379
    %v1943 = vunpack.c.h.b16 %v1379
    %v1944 = vunpack.c.l.b16 %v1380
    %v1945 = vunpack.c.l.b16 %v1381
    %v1946 = vunpack.c.h.b16 %v1381
    %v1947 = vunpack.c.l.b16 %v1382
    %v1948 = vunpack.c.h.b16 %v1382
    %v1949 = vunpack.c.l.b16 %v1383
    %v1950 = vunpack.c.l.b16 %v1384
    %v1951 = vunpack.c.h.b16 %v1384
    %v1952 = vunpack.c.l.b16 %v1385
    %v1953 = vunpack.c.h.b16 %v1385
    %v1954 = vunpack.c.l.b16 %v1386
    %v1955 = vunpack.c.l.b16 %v1387
    %v1956 = vunpack.c.h.b16 %v1387
    %v1957 = vunpack.c.l.b16 %v1388
    %v1958 = vunpack.c.h.b16 %v1388
    %v1959 = vunpack.c.l.b16 %v1389
    %v1960 = vunpack.c.l.b16 %v1390
    %v1961 = vunpack.c.h.b16 %v1390
    %v1962 = vunpack.c.l.b16 %v1391
    %v1963 = vunpack.c.h.b16 %v1391
    %v1964 = vunpack.c.l.b16 %v1392
    %v1965 = vunpack.c.l.b16 %v1393
    %v1966 = vunpack.c.h.b16 %v1393
    %v1967 = vunpack.c.l.b16 %v1394
    %v1968 = vunpack.c.h.b16 %v1394
    %v1969 = vunpack.c.l.b16 %v1395
    %v1970 = vunpack.c.l.b16 %v1396
    %v1971 = vunpack.c.h.b16 %v1396
    %v1972 = vunpack.c.l.b16 %v1397
    %v1973 = vunpack.c.h.b16 %v1397
    %v1974 = vunpack.c.l.b16 %v1398
    %v1975 = vunpack.c.l.b16 %v1399
    %v1976 = vunpack.c.h.b16 %v1399
    %v1977 = vunpack.c.l.b16 %v1400
    %v1978 = vunpack.c.h.b16 %v1400
    %v1979 = vunpack.c.l.b16 %v1401
    %v1980 = vunpack.c.l.b16 %v1402
    %v1981 = vunpack.c.h.b16 %v1402
    %v1982 = vunpack.c.l.b16 %v1403
    %v1983 = vunpack.c.h.b16 %v1403
    %v1984 = vunpack.c.l.b16 %v1404
    %v1985 = vunpack.c.l.b16 %v1405
    %v1986 = vunpack.c.h.b16 %v1405
    %v1987 = vunpack.c.l.b16 %v1406
    %v1988 = vunpack.c.h.b16 %v1406
    %v1989 = vunpack.c.l.b16 %v1407
    %v1990 = vunpack.c.l.b16 %v1408
    %v1991 = vunpack.c.h.b16 %v1408
    %v1992 = vunpack.c.l.b16 %v1409
    %v1993 = vunpack.c.h.b16 %v1409
    %v1994 = vunpack.c.l.b16 %v1410
    %v1995 = vunpack.c.l.b16 %v1411
    %v1996 = vunpack.c.h.b16 %v1411
    %v1997 = vunpack.c.l.b16 %v1412
    %v1998 = vunpack.c.h.b16 %v1412
    %v1999 = vunpack.c.l.b16 %v1413
    %v2000 = vunpack.c.l.b16 %v1414
    %v2001 = vunpack.c.h.b16 %v1414
    %v2002 = vunpack.c.l.b16 %v1415
    %v2003 = vunpack.c.h.b16 %v1415
    %v2004 = vunpack.c.l.b16 %v1416
    %v2005 = vunpack.c.l.b16 %v1417
    %v2006 = vunpack.c.h.b16 %v1417
    %v2007 = vunpack.c.l.b16 %v1418
    %v2008 = vunpack.c.h.b16 %v1418
    %v2009 = vunpack.c.l.b16 %v1419
    %v2010 = vunpack.c.l.b16 %v1420
    %v2011 = vunpack.c.h.b16 %v1420
    %v2012 = vunpack.c.l.b16 %v1421
    %v2013 = vunpack.c.h.b16 %v1421
    %v2014 = vunpack.c.l.b16 %v1422
    %v2015 = vunpack.c.l.b16 %v1423
    %v2016 = vunpack.c.h.b16 %v1423
    %v2017 = vunpack.c.l.b16 %v1424
    %v2018 = vunpack.c.h.b16 %v1424
    %v2019 = vunpack.c.l.b16 %v1425
    %v2020 = vunpack.c.l.b16 %v1426
    %v2021 = vunpack.c.h.b16 %v1426
    %v2022 = vunpack.c.l.b16 %v1427
    %v2023 = vunpack.c.h.b16 %v1427
    %v2024 = vunpack.c.l.b16 %v1428
    %v2025 = vunpack.c.l.b16 %v1429
    %v2026 = vunpack.c.h.b16 %v1429
    %v2027 = vunpack.c.l.b16 %v1430
    %v2028 = vunpack.c.h.b16 %v1430
    %v2029 = vunpack.c.l.b16 %v1431
    %v2030 = vunpack.c.l.b16 %v1432
    %v2031 = vunpack.c.h.b16 %v1432
    %v2032 = vunpack.c.l.b16 %v1433
    %v2033 = vunpack.c.h.b16 %v1433
    %v2034 = vunpack.c.l.b16 %v1434
    %v2035 = vunpack.c.l.b16 %v1435
    %v2036 = vunpack.c.h.b16 %v1435
    %v2037 = vunpack.c.l.b16 %v1436
    %v2038 = vunpack.c.h.b16 %v1436
    %v2039 = vunpack.c.l.b16 %v1437
    %v2040 = vunpack.c.l.b16 %v1438
    %v2041 = vunpack.c.h.b16 %v1438
    %v2042 = vunpack.c.l.b16 %v1439
    %v2043 = vunpack.c.h.b16 %v1439
    %v2044 = vunpack.c.l.b16 %v1440
    %v2045 = vunpack.c.l.b16 %v1441
    %v2046 = vunpack.c.h.b16 %v1441
    %v2047 = vunpack.c.l.b16 %v1442
    %v2048 = vunpack.c.h.b16 %v1442
    %v2049 = vunpack.c.l.b16 %v1443
    %v2050 = vunpack.c.l.b16 %v1444
    %v2051 = vunpack.c.h.b16 %v1444
    %v2052 = vunpack.c.l.b16 %v1445
    %v2053 = vunpack.c.h.b16 %v1445
    %v2054 = vunpack.c.l.b16 %v1446
    %v2055 = vunpack.c.l.b16 %v1447
    %v2056 = vunpack.c.h.b16 %v1447
    %v2057 = vunpack.c.l.b16 %v1448
    %v2058 = vunpack.c.h.b16 %v1448
    %v2059 = vunpack.c.l.b16 %v1449
    %v2060 = vunpack.c.l.b16 %v1450
    %v2061 = vunpack.c.h.b16 %v1450
    %v2062 = vunpack.c.l.b16 %v1451
    %v2063 = vunpack.c.h.b16 %v1451
    %v2064 = vunpack.c.l.b16 %v1452
    %v2065 = vunpack.c.l.b16 %v1453
    %v2066 = vunpack.c.h.b16 %v1453
    %v2067 = vunpack.c.l.b16 %v1454
    %v2068 = vunpack.c.h.b16 %v1454
    %v2069 = vunpack.c.l.b16 %v1455
    %v2070 = vunpack.c.l.b16 %v1456
    %v2071 = vunpack.c.h.b16 %v1456
    %v2072 = vunpack.c.l.b16 %v1457
    %v2073 = vunpack.c.h.b16 %v1457
    %v2074 = vunpack.c.l.b16 %v1458
    %v2075 = vunpack.c.l.b16 %v1459
    %v2076 = vunpack.c.h.b16 %v1459
    %v2077 = vunpack.c.l.b16 %v1460
    %v2078 = vunpack.c.h.b16 %v1460
    %v2079 = vunpack.c.l.b16 %v1461
    %v2080 = vunpack.c.l.b16 %v1462
    %v2081 = vunpack.c.h.b16 %v1462
    %v2082 = vunpack.c.l.b16 %v1463
    %v2083 = vunpack.c.h.b16 %v1463
    %v2084 = vunpack.c.l.b16 %v1464
    %v2085 = vunpack.c.l.b16 %v1465
    %v2086 = vunpack.c.h.b16 %v1465
    %v2087 = vunpack.c.l.b16 %v1466
    %v2088 = vunpack.c.h.b16 %v1466
    %v2089 = vunpack.c.l.b16 %v1467
    %v2090 = vunpack.c.l.b16 %v1468
    %v2091 = vunpack.c.h.b16 %v1468
    %v2092 = vunpack.c.l.b16 %v1469
    %v2093 = vunpack.c.h.b16 %v1469
    %v2094 = vunpack.c.l.b16 %v1470
    %v2095 = vunpack.c.l.b16 %v1471
    %v2096 = vunpack.c.h.b16 %v1471
    %v2097 = vunpack.c.l.b16 %v1472
    %v2098 = vunpack.c.h.b16 %v1472
    %v2099 = vunpack.c.l.b16 %v1473
    %v2100 = vunpack.c.l.b16 %v1474
    %v2101 = vunpack.c.h.b16 %v1474
    %v2102 = vunpack.c.l.b16 %v1475
    %v2103 = vunpack.c.h.b16 %v1475
    %v2104 = vunpack.c.l.b16 %v1476
    %v2105 = vunpack.c.l.b16 %v1477
    %v2106 = vunpack.c.h.b16 %v1477
    %v2107 = vunpack.c.l.b16 %v1478
    %v2108 = vunpack.c.h.b16 %v1478
    %v2109 = vunpack.c.l.b16 %v1479
    %v2110 = vunpack.c.l.b16 %v1480
    %v2111 = vunpack.c.h.b16 %v1480
    %v2112 = vunpack.c.l.b16 %v1481
    %v2113 = vunpack.c.h.b16 %v1481
    %v2114 = vunpack.c.l.b16 %v1482
    %v2115 = vunpack.c.l.b16 %v1483
    %v2116 = vunpack.c.h.b16 %v1483
    %v2117 = vunpack.c.l.b16 %v1484
    %v2118 = vunpack.c.h.b16 %v1484
    %v2119 = vunpack.c.l.b16 %v1485
    %v2120 = vunpack.c.l.b16 %v1486
    %v2121 = vunpack.c.h.b16 %v1486
    %v2122 = vunpack.c.l.b16 %v1487
    %v2123 = vunpack.c.h.b16 %v1487
    %v2124 = vunpack.c.l.b16 %v1488
    %v2125 = vunpack.c.l.b16 %v1489
    %v2126 = vunpack.c.h.b16 %v1489
    %v2127 = vunpack.c.l.b16 %v1490
    %v2128 = vunpack.c.h.b16 %v1490
    %v2129 = vunpack.c.l.b16 %v1491
    %v2130 = vunpack.c.l.b16 %v1492
    %v2131 = vunpack.c.h.b16 %v1492
    %v2132 = vunpack.c.l.b16 %v1493
    %v2133 = vunpack.c.h.b16 %v1493
    %v2134 = vunpack.c.l.b16 %v1494
    %v2135 = vunpack.c.l.b16 %v1495
    %v2136 = vunpack.c.h.b16 %v1495
    %v2137 = vunpack.c.l.b16 %v1496
    %v2138 = vunpack.c.h.b16 %v1496
    %v2139 = vunpack.c.l.b16 %v1497
    %v2140 = vunpack.c.l.b16 %v1498
    %v2141 = vunpack.c.h.b16 %v1498
    %v2142 = vunpack.c.l.b16 %v1499
    %v2143 = vunpack.c.h.b16 %v1499
    %v2144 = vunpack.c.l.b16 %v1500
    %v2145 = vunpack.c.l.b16 %v1501
    %v2146 = vunpack.c.h.b16 %v1501
    %v2147 = vunpack.c.l.b16 %v1502
    %v2148 = vunpack.c.h.b16 %v1502
    %v2149 = vunpack.c.l.b16 %v1503
    %v2150 = vunpack.c.l.b16 %v1504
    %v2151 = vunpack.c.h.b16 %v1504
    %v2152 = vunpack.c.l.b16 %v1505
    %v2153 = vunpack.c.h.b16 %v1505
    %v2154 = vunpack.c.l.b16 %v1506
    %v2155 = vunpack.c.l.b16 %v1507
    %v2156 = vunpack.c.h.b16 %v1507
    %v2157 = vunpack.c.l.b16 %v1508
    %v2158 = vunpack.c.h.b16 %v1508
    %v2159 = vunpack.c.l.b16 %v1509
    %v2160 = vunpack.c.l.b16 %v1510
    %v2161 = vunpack.c.h.b16 %v1510
    %v2162 = vunpack.c.l.b16 %v1511
    %v2163 = vunpack.c.h.b16 %v1511
    %v2164 = vunpack.c.l.b16 %v1512
    %v2165 = vpack.c.b16 %v1770, %v1765
    %v2166 = vpack.c.b16 %v1771, %v1766
    %v2167 = vpack.c.b16 %v1772, %v1767
    %v2168 = vpack.c.b16 %v1773, %v1768
    %v2169 = vpack.c.b16 %v1774, %v1769
    %v2170 = vpack.c.b16 %v1780, %v1775
    %v2171 = vpack.c.b16 %v1781, %v1776
    %v2172 = vpack.c.b16 %v1782, %v1777
    %v2173 = vpack.c.b16 %v1783, %v1778
    %v2174 = vpack.c.b16 %v1784, %v1779
    %v2175 = vpack.c.b16 %v1790, %v1785
    %v2176 = vpack.c.b16 %v1791, %v1786
    %v2177 = vpack.c.b16 %v1792, %v1787
    %v2178 = vpack.c.b16 %v1793, %v1788
    %v2179 = vpack.c.b16 %v1794, %v1789
    %v2180 = vpack.c.b16 %v1800, %v1795
    %v2181 = vpack.c.b16 %v1801, %v1796
    %v2182 = vpack.c.b16 %v1802, %v1797
    %v2183 = vpack.c.b16 %v1803, %v1798
    %v2184 = vpack.c.b16 %v1804, %v1799
    %v2185 = vpack.c.b16 %v1810, %v1805
    %v2186 = vpack.c.b16 %v1811, %v1806
    %v2187 = vpack.c.b16 %v1812, %v1807
    %v2188 = vpack.c.b16 %v1813, %v1808
    %v2189 = vpack.c.b16 %v1814, %v1809
    %v2190 = vpack.c.b16 %v1820, %v1815
    %v2191 = vpack.c.b16 %v1821, %v1816
    %v2192 = vpack.c.b16 %v1822, %v1817
    %v2193 = vpack.c.b16 %v1823, %v1818
    %v2194 = vpack.c.b16 %v1824, %v1819
    %v2195 = vpack.c.b16 %v1830, %v1825
    %v2196 = vpack.c.b16 %v1831, %v1826
    %v2197 = vpack.c.b16 %v1832, %v1827
    %v2198 = vpack.c.b16 %v1833, %v1828
    %v2199 = vpack.c.b16 %v1834, %v1829
    %v2200 = vpack.c.b16 %v1840, %v1835
    %v2201 = vpack.c.b16 %v1841, %v1836
    %v2202 = vpack.c.b16 %v1842, %v1837
    %v2203 = vpack.c.b16 %v1843, %v1838
    %v2204 = vpack.c.b16 %v1844, %v1839
    %v2205 = vpack.c.b16 %v1850, %v1845
    %v2206 = vpack.c.b16 %v1851, %v1846
    %v2207 = vpack.c.b16 %v1852, %v1847
    %v2208 = vpack.c.b16 %v1853, %v1848
    %v2209 = vpack.c.b16 %v1854, %v1849
    %v2210 = vpack.c.b16 %v1860, %v1855
    %v2211 = vpack.c.b16 %v1861, %v1856
    %v2212 = vpack.c.b16 %v1862, %v1857
    %v2213 = vpack.c.b16 %v1863, %v1858
    %v2214 = vpack.c.b16 %v1864, %v1859
    %v2215 = vpack.c.b16 %v1870, %v1865
    %v2216 = vpack.c.b16 %v1871, %v1866
    %v2217 = vpack.c.b16 %v1872, %v1867
    %v2218 = vpack.c.b16 %v1873, %v1868
    %v2219 = vpack.c.b16 %v1874, %v1869
    %v2220 = vpack.c.b16 %v1880, %v1875
    %v2221 = vpack.c.b16 %v1881, %v1876
    %v2222 = vpack.c.b16 %v1882, %v1877
    %v2223 = vpack.c.b16 %v1883, %v1878
    %v2224 = vpack.c.b16 %v1884, %v1879
    %v2225 = vpack.c.b16 %v1890, %v1885
    %v2226 = vpack.c.b16 %v1891, %v1886
    %v2227 = vpack.c.b16 %v1892, %v1887
    %v2228 = vpack.c.b16 %v1893, %v1888
    %v2229 = vpack.c.b16 %v1894, %v1889
    %v2230 = vpack.c.b16 %v1900, %v1895
    %v2231 = vpack.c.b16 %v1901, %v1896
    %v2232 = vpack.c.b16 %v1902, %v1897
    %v2233 = vpack.c.b16 %v1903, %v1898
    %v2234 = vpack.c.b16 %v1904, %v1899
    %v2235 = vpack.c.b16 %v1910, %v1905
    %v2236 = vpack.c.b16 %v1911, %v1906
    %v2237 = vpack.c.b16 %v1912, %v1907
    %v2238 = vpack.c.b16 %v1913, %v1908
    %v2239 = vpack.c.b16 %v1914, %v1909
    %v2240 = vpack.c.b16 %v1920, %v1915
    %v2241 = vpack.c.b16 %v1921, %v1916
    %v2242 = vpack.c.b16 %v1922, %v1917
    %v2243 = vpack.c.b16 %v1923, %v1918
    %v2244 = vpack.c.b16 %v1924, %v1919
    %v2245 = vpack.c.b16 %v1930, %v1925
    %v2246 = vpack.c.b16 %v1931, %v1926
    %v2247 = vpack.c.b16 %v1932, %v1927
    %v2248 = vpack.c.b16 %v1933, %v1928
    %v2249 = vpack.c.b16 %v1934, %v1929
    %v2250 = vpack.c.b16 %v1940, %v1935
    %v2251 = vpack.c.b16 %v1941, %v1936
    %v2252 = vpack.c.b16 %v1942, %v1937
    %v2253 = vpack.c.b16 %v1943, %v1938
    %v2254 = vpack.c.b16 %v1944, %v1939
    %v2255 = vpack.c.b16 %v1950, %v1945
    %v2256 = vpack.c.b16 %v1951, %v1946
    %v2257 = vpack.c.b16 %v1952, %v1947
    %v2258 = vpack.c.b16 %v1953, %v1948
    %v2259 = vpack.c.b16 %v1954, %v1949
    %v2260 = vpack.c.b16 %v1960, %v1955
    %v2261 = vpack.c.b16 %v1961, %v1956
    %v2262 = vpack.c.b16 %v1962, %v1957
    %v2263 = vpack.c.b16 %v1963, %v1958
    %v2264 = vpack.c.b16 %v1964, %v1959
    %v2265 = vpack.c.b16 %v1970, %v1965
    %v2266 = vpack.c.b16 %v1971, %v1966
    %v2267 = vpack.c.b16 %v1972, %v1967
    %v2268 = vpack.c.b16 %v1973, %v1968
    %v2269 = vpack.c.b16 %v1974, %v1969
    %v2270 = vpack.c.b16 %v1980, %v1975
    %v2271 = vpack.c.b16 %v1981, %v1976
    %v2272 = vpack.c.b16 %v1982, %v1977
    %v2273 = vpack.c.b16 %v1983, %v1978
    %v2274 = vpack.c.b16 %v1984, %v1979
    %v2275 = vpack.c.b16 %v1990, %v1985
    %v2276 = vpack.c.b16 %v1991, %v1986
    %v2277 = vpack.c.b16 %v1992, %v1987
    %v2278 = vpack.c.b16 %v1993, %v1988
    %v2279 = vpack.c.b16 %v1994, %v1989
    %v2280 = vpack.c.b16 %v2000, %v1995
    %v2281 = vpack.c.b16 %v2001, %v1996
    %v2282 = vpack.c.b16 %v2002, %v1997
    %v2283 = vpack.c.b16 %v2003, %v1998
    %v2284 = vpack.c.b16 %v2004, %v1999
    %v2285 = vpack.c.b16 %v2010, %v2005
    %v2286 = vpack.c.b16 %v2011, %v2006
    %v2287 = vpack.c.b16 %v2012, %v2007
    %v2288 = vpack.c.b16 %v2013, %v2008
    %v2289 = vpack.c.b16 %v2014, %v2009
    %v2290 = vpack.c.b16 %v2020, %v2015
    %v2291 = vpack.c.b16 %v2021, %v2016
    %v2292 = vpack.c.b16 %v2022, %v2017
    %v2293 = vpack.c.b16 %v2023, %v2018
    %v2294 = vpack.c.b16 %v2024, %v2019
    %v2295 = vpack.c.b16 %v2030, %v2025
    %v2296 = vpack.c.b16 %v2031, %v2026
    %v2297 = vpack.c.b16 %v2032, %v2027
    %v2298 = vpack.c.b16 %v2033, %v2028
    %v2299 = vpack.c.b16 %v2034, %v2029
    %v2300 = vpack.c.b16 %v2040, %v2035
    %v2301 = vpack.c.b16 %v2041, %v2036
    %v2302 = vpack.c.b16 %v2042, %v2037
    %v2303 = vpack.c.b16 %v2043, %v2038
    %v2304 = vpack.c.b16 %v2044, %v2039
    %v2305 = vpack.c.b16 %v2050, %v2045
    %v2306 = vpack.c.b16 %v2051, %v2046
    %v2307 = vpack.c.b16 %v2052, %v2047
    %v2308 = vpack.c.b16 %v2053, %v2048
    %v2309 = vpack.c.b16 %v2054, %v2049
    %v2310 = vpack.c.b16 %v2060, %v2055
    %v2311 = vpack.c.b16 %v2061, %v2056
    %v2312 = vpack.c.b16 %v2062, %v2057
    %v2313 = vpack.c.b16 %v2063, %v2058
    %v2314 = vpack.c.b16 %v2064, %v2059
    %v2315 = vpack.c.b16 %v2070, %v2065
    %v2316 = vpack.c.b16 %v2071, %v2066
    %v2317 = vpack.c.b16 %v2072, %v2067
    %v2318 = vpack.c.b16 %v2073, %v2068
    %v2319 = vpack.c.b16 %v2074, %v2069
    %v2320 = vpack.c.b16 %v2080, %v2075
    %v2321 = vpack.c.b16 %v2081, %v2076
    %v2322 = vpack.c.b16 %v2082, %v2077
    %v2323 = vpack.c.b16 %v2083, %v2078
    %v2324 = vpack.c.b16 %v2084, %v2079
    %v2325 = vpack.c.b16 %v2090, %v2085
    %v2326 = vpack.c.b16 %v2091, %v2086
    %v2327 = vpack.c.b16 %v2092, %v2087
    %v2328 = vpack.c.b16 %v2093, %v2088
    %v2329 = vpack.c.b16 %v2094, %v2089
    %v2330 = vpack.c.b16 %v2100, %v2095
    %v2331 = vpack.c.b16 %v2101, %v2096
    %v2332 = vpack.c.b16 %v2102, %v2097
    %v2333 = vpack.c.b16 %v2103, %v2098
    %v2334 = vpack.c.b16 %v2104, %v2099
    %v2335 = vpack.c.b16 %v2110, %v2105
    %v2336 = vpack.c.b16 %v2111, %v2106
    %v2337 = vpack.c.b16 %v2112, %v2107
    %v2338 = vpack.c.b16 %v2113, %v2108
    %v2339 = vpack.c.b16 %v2114, %v2109
    %v2340 = vpack.c.b16 %v2120, %v2115
    %v2341 = vpack.c.b16 %v2121, %v2116
    %v2342 = vpack.c.b16 %v2122, %v2117
    %v2343 = vpack.c.b16 %v2123, %v2118
    %v2344 = vpack.c.b16 %v2124, %v2119
    %v2345 = vpack.c.b16 %v2130, %v2125
    %v2346 = vpack.c.b16 %v2131, %v2126
    %v2347 = vpack.c.b16 %v2132, %v2127
    %v2348 = vpack.c.b16 %v2133, %v2128
    %v2349 = vpack.c.b16 %v2134, %v2129
    %v2350 = vpack.c.b16 %v2140, %v2135
    %v2351 = vpack.c.b16 %v2141, %v2136
    %v2352 = vpack.c.b16 %v2142, %v2137
    %v2353 = vpack.c.b16 %v2143, %v2138
    %v2354 = vpack.c.b16 %v2144, %v2139
    %v2355 = vpack.c.b16 %v2150, %v2145
    %v2356 = vpack.c.b16 %v2151, %v2146
    %v2357 = vpack.c.b16 %v2152, %v2147
    %v2358 = vpack.c.b16 %v2153, %v2148
    %v2359 = vpack.c.b16 %v2154, %v2149
    %v2360 = vpack.c.b16 %v2160, %v2155
    %v2361 = vpack.c.b16 %v2161, %v2156
    %v2362 = vpack.c.b16 %v2162, %v2157
    %v2363 = vpack.c.b16 %v2163, %v2158
    %v2364 = vpack.c.b16 %v2164, %v2159
    %2565 = vmatpush.bf16.msra.mxu0 %v2200
    %2566 = vmatpush.bf16.msra.mxu0 %v2195
    %2567 = vmatpush.bf16.msra.mxu0 %v2190
    %2568 = vmatpush.bf16.msra.mxu0 %v2185
    %2569 = vmatpush.bf16.msra.mxu0 %v2180
    %2570 = vmatpush.bf16.msra.mxu0 %v2175
    %2571 = vmatpush.bf16.msra.mxu0 %v2170
    %2572 = vmatpush.bf16.msra.mxu0 %v2165
    %2573 = vmatmul.bf16.gmra.mxu0 %v1268
    %v2574 = vpop.f32.mrf.mxu0
    %v2575 = vadd.f32 %v1515, %v2574
    %v2576 = vpop.f32.mrf.mxu0
    %2577 = vdwg.mxu0
    %2578 = vmatpush.bf16.msra.mxu0 %v2240
    %2579 = vmatpush.bf16.msra.mxu0 %v2235
    %2580 = vmatpush.bf16.msra.mxu0 %v2230
    %2581 = vmatpush.bf16.msra.mxu0 %v2225
    %2582 = vmatpush.bf16.msra.mxu0 %v2220
    %2583 = vmatpush.bf16.msra.mxu0 %v2215
    %2584 = vmatpush.bf16.msra.mxu0 %v2210
    %2585 = vmatpush.bf16.msra.mxu0 %v2205
    %2586 = vmatmul.bf16.gmra.mxu0 %v1269
    %v2587 = vpop.f32.mrf.mxu0
    %v2588 = vadd.f32 %v2575, %v2587
    %v2589 = vpop.f32.mrf.mxu0
    %2590 = vdwg.mxu0
    %2591 = vmatpush.bf16.msra.mxu0 %v2280
    %2592 = vmatpush.bf16.msra.mxu0 %v2275
    %2593 = vmatpush.bf16.msra.mxu0 %v2270
    %2594 = vmatpush.bf16.msra.mxu0 %v2265
    %2595 = vmatpush.bf16.msra.mxu0 %v2260
    %2596 = vmatpush.bf16.msra.mxu0 %v2255
    %2597 = vmatpush.bf16.msra.mxu0 %v2250
    %2598 = vmatpush.bf16.msra.mxu0 %v2245
    %2599 = vmatmul.bf16.gmra.mxu0 %v1270
    %v2600 = vpop.f32.mrf.mxu0
    %v2601 = vadd.f32 %v2588, %v2600
    %v2602 = vpop.f32.mrf.mxu0
    %2603 = vdwg.mxu0
    %2604 = vmatpush.bf16.msra.mxu0 %v2320
    %2605 = vmatpush.bf16.msra.mxu0 %v2315
    %2606 = vmatpush.bf16.msra.mxu0 %v2310
    %2607 = vmatpush.bf16.msra.mxu0 %v2305
    %2608 = vmatpush.bf16.msra.mxu0 %v2300
    %2609 = vmatpush.bf16.msra.mxu0 %v2295
    %2610 = vmatpush.bf16.msra.mxu0 %v2290
    %2611 = vmatpush.bf16.msra.mxu0 %v2285
    %2612 = vmatmul.bf16.gmra.mxu0 %v1271
    %v2613 = vpop.f32.mrf.mxu0
    %v2614 = vadd.f32 %v2601, %v2613
    %v2615 = vpop.f32.mrf.mxu0
    %2616 = vdwg.mxu0
    %2617 = vmatpush.bf16.msra.mxu0 %v2360
    %2618 = vmatpush.bf16.msra.mxu0 %v2355
    %2619 = vmatpush.bf16.msra.mxu0 %v2350
    %2620 = vmatpush.bf16.msra.mxu0 %v2345
    %2621 = vmatpush.bf16.msra.mxu0 %v2340
    %2622 = vmatpush.bf16.msra.mxu0 %v2335
    %2623 = vmatpush.bf16.msra.mxu0 %v2330
    %2624 = vmatpush.bf16.msra.mxu0 %v2325
    %2625 = vmatmul.bf16.gmra.mxu0 %v1272
    %v2626 = vpop.f32.mrf.mxu0
    %v2627 = vadd.f32 %v2614, %v2626
    %v2628 = vpop.f32.mrf.mxu0
    %2629 = vdwg.mxu0
    %2630 = vmatpush.bf16.msra.mxu0 %v2201
    %2631 = vmatpush.bf16.msra.mxu0 %v2196
    %2632 = vmatpush.bf16.msra.mxu0 %v2191
    %2633 = vmatpush.bf16.msra.mxu0 %v2186
    %2634 = vmatpush.bf16.msra.mxu0 %v2181
    %2635 = vmatpush.bf16.msra.mxu0 %v2176
    %2636 = vmatpush.bf16.msra.mxu0 %v2171
    %2637 = vmatpush.bf16.msra.mxu0 %v2166
    %2638 = vmatmul.bf16.gmra.mxu0 %v1268
    %v2639 = vpop.f32.mrf.mxu0
    %v2640 = vadd.f32 %v1516, %v2639
    %v2641 = vpop.f32.mrf.mxu0
    %2642 = vdwg.mxu0
    %2643 = vmatpush.bf16.msra.mxu0 %v2241
    %2644 = vmatpush.bf16.msra.mxu0 %v2236
    %2645 = vmatpush.bf16.msra.mxu0 %v2231
    %2646 = vmatpush.bf16.msra.mxu0 %v2226
    %2647 = vmatpush.bf16.msra.mxu0 %v2221
    %2648 = vmatpush.bf16.msra.mxu0 %v2216
    %2649 = vmatpush.bf16.msra.mxu0 %v2211
    %2650 = vmatpush.bf16.msra.mxu0 %v2206
    %2651 = vmatmul.bf16.gmra.mxu0 %v1269
    %v2652 = vpop.f32.mrf.mxu0
    %v2653 = vadd.f32 %v2640, %v2652
    %v2654 = vpop.f32.mrf.mxu0
    %2655 = vdwg.mxu0
    %2656 = vmatpush.bf16.msra.mxu0 %v2281
    %2657 = vmatpush.bf16.msra.mxu0 %v2276
    %2658 = vmatpush.bf16.msra.mxu0 %v2271
    %2659 = vmatpush.bf16.msra.mxu0 %v2266
    %2660 = vmatpush.bf16.msra.mxu0 %v2261
    %2661 = vmatpush.bf16.msra.mxu0 %v2256
    %2662 = vmatpush.bf16.msra.mxu0 %v2251
    %2663 = vmatpush.bf16.msra.mxu0 %v2246
    %2664 = vmatmul.bf16.gmra.mxu0 %v1270
    %v2665 = vpop.f32.mrf.mxu0
    %v2666 = vadd.f32 %v2653, %v2665
    %v2667 = vpop.f32.mrf.mxu0
    %2668 = vdwg.mxu0
    %2669 = vmatpush.bf16.msra.mxu0 %v2321
    %2670 = vmatpush.bf16.msra.mxu0 %v2316
    %2671 = vmatpush.bf16.msra.mxu0 %v2311
    %2672 = vmatpush.bf16.msra.mxu0 %v2306
    %2673 = vmatpush.bf16.msra.mxu0 %v2301
    %2674 = vmatpush.bf16.msra.mxu0 %v2296
    %2675 = vmatpush.bf16.msra.mxu0 %v2291
    %2676 = vmatpush.bf16.msra.mxu0 %v2286
    %2677 = vmatmul.bf16.gmra.mxu0 %v1271
    %v2678 = vpop.f32.mrf.mxu0
    %v2679 = vadd.f32 %v2666, %v2678
    %v2680 = vpop.f32.mrf.mxu0
    %2681 = vdwg.mxu0
    %2682 = vmatpush.bf16.msra.mxu0 %v2361
    %2683 = vmatpush.bf16.msra.mxu0 %v2356
    %2684 = vmatpush.bf16.msra.mxu0 %v2351
    %2685 = vmatpush.bf16.msra.mxu0 %v2346
    %2686 = vmatpush.bf16.msra.mxu0 %v2341
    %2687 = vmatpush.bf16.msra.mxu0 %v2336
    %2688 = vmatpush.bf16.msra.mxu0 %v2331
    %2689 = vmatpush.bf16.msra.mxu0 %v2326
    %2690 = vmatmul.bf16.gmra.mxu0 %v1272
    %v2691 = vpop.f32.mrf.mxu0
    %v2692 = vadd.f32 %v2679, %v2691
    %v2693 = vpop.f32.mrf.mxu0
    %2694 = vdwg.mxu0
    %2695 = vmatpush.bf16.msra.mxu0 %v2202
    %2696 = vmatpush.bf16.msra.mxu0 %v2197
    %2697 = vmatpush.bf16.msra.mxu0 %v2192
    %2698 = vmatpush.bf16.msra.mxu0 %v2187
    %2699 = vmatpush.bf16.msra.mxu0 %v2182
    %2700 = vmatpush.bf16.msra.mxu0 %v2177
    %2701 = vmatpush.bf16.msra.mxu0 %v2172
    %2702 = vmatpush.bf16.msra.mxu0 %v2167
    %2703 = vmatmul.bf16.gmra.mxu0 %v1268
    %v2704 = vpop.f32.mrf.mxu0
    %v2705 = vadd.f32 %v1517, %v2704
    %v2706 = vpop.f32.mrf.mxu0
    %2707 = vdwg.mxu0
    %2708 = vmatpush.bf16.msra.mxu0 %v2242
    %2709 = vmatpush.bf16.msra.mxu0 %v2237
    %2710 = vmatpush.bf16.msra.mxu0 %v2232
    %2711 = vmatpush.bf16.msra.mxu0 %v2227
    %2712 = vmatpush.bf16.msra.mxu0 %v2222
    %2713 = vmatpush.bf16.msra.mxu0 %v2217
    %2714 = vmatpush.bf16.msra.mxu0 %v2212
    %2715 = vmatpush.bf16.msra.mxu0 %v2207
    %2716 = vmatmul.bf16.gmra.mxu0 %v1269
    %v2717 = vpop.f32.mrf.mxu0
    %v2718 = vadd.f32 %v2705, %v2717
    %v2719 = vpop.f32.mrf.mxu0
    %2720 = vdwg.mxu0
    %2721 = vmatpush.bf16.msra.mxu0 %v2282
    %2722 = vmatpush.bf16.msra.mxu0 %v2277
    %2723 = vmatpush.bf16.msra.mxu0 %v2272
    %2724 = vmatpush.bf16.msra.mxu0 %v2267
    %2725 = vmatpush.bf16.msra.mxu0 %v2262
    %2726 = vmatpush.bf16.msra.mxu0 %v2257
    %2727 = vmatpush.bf16.msra.mxu0 %v2252
    %2728 = vmatpush.bf16.msra.mxu0 %v2247
    %2729 = vmatmul.bf16.gmra.mxu0 %v1270
    %v2730 = vpop.f32.mrf.mxu0
    %v2731 = vadd.f32 %v2718, %v2730
    %v2732 = vpop.f32.mrf.mxu0
    %2733 = vdwg.mxu0
    %2734 = vmatpush.bf16.msra.mxu0 %v2322
    %2735 = vmatpush.bf16.msra.mxu0 %v2317
    %2736 = vmatpush.bf16.msra.mxu0 %v2312
    %2737 = vmatpush.bf16.msra.mxu0 %v2307
    %2738 = vmatpush.bf16.msra.mxu0 %v2302
    %2739 = vmatpush.bf16.msra.mxu0 %v2297
    %2740 = vmatpush.bf16.msra.mxu0 %v2292
    %2741 = vmatpush.bf16.msra.mxu0 %v2287
    %2742 = vmatmul.bf16.gmra.mxu0 %v1271
    %v2743 = vpop.f32.mrf.mxu0
    %v2744 = vadd.f32 %v2731, %v2743
    %v2745 = vpop.f32.mrf.mxu0
    %2746 = vdwg.mxu0
    %2747 = vmatpush.bf16.msra.mxu0 %v2362
    %2748 = vmatpush.bf16.msra.mxu0 %v2357
    %2749 = vmatpush.bf16.msra.mxu0 %v2352
    %2750 = vmatpush.bf16.msra.mxu0 %v2347
    %2751 = vmatpush.bf16.msra.mxu0 %v2342
    %2752 = vmatpush.bf16.msra.mxu0 %v2337
    %2753 = vmatpush.bf16.msra.mxu0 %v2332
    %2754 = vmatpush.bf16.msra.mxu0 %v2327
    %2755 = vmatmul.bf16.gmra.mxu0 %v1272
    %v2756 = vpop.f32.mrf.mxu0
    %v2757 = vadd.f32 %v2744, %v2756
    %v2758 = vpop.f32.mrf.mxu0
    %2759 = vdwg.mxu0
    %2760 = vmatpush.bf16.msra.mxu0 %v2203
    %2761 = vmatpush.bf16.msra.mxu0 %v2198
    %2762 = vmatpush.bf16.msra.mxu0 %v2193
    %2763 = vmatpush.bf16.msra.mxu0 %v2188
    %2764 = vmatpush.bf16.msra.mxu0 %v2183
    %2765 = vmatpush.bf16.msra.mxu0 %v2178
    %2766 = vmatpush.bf16.msra.mxu0 %v2173
    %2767 = vmatpush.bf16.msra.mxu0 %v2168
    %2768 = vmatmul.bf16.gmra.mxu0 %v1268
    %v2769 = vpop.f32.mrf.mxu0
    %v2770 = vadd.f32 %v1518, %v2769
    %v2771 = vpop.f32.mrf.mxu0
    %2772 = vdwg.mxu0
    %2773 = vmatpush.bf16.msra.mxu0 %v2243
    %2774 = vmatpush.bf16.msra.mxu0 %v2238
    %2775 = vmatpush.bf16.msra.mxu0 %v2233
    %2776 = vmatpush.bf16.msra.mxu0 %v2228
    %2777 = vmatpush.bf16.msra.mxu0 %v2223
    %2778 = vmatpush.bf16.msra.mxu0 %v2218
    %2779 = vmatpush.bf16.msra.mxu0 %v2213
    %2780 = vmatpush.bf16.msra.mxu0 %v2208
    %2781 = vmatmul.bf16.gmra.mxu0 %v1269
    %v2782 = vpop.f32.mrf.mxu0
    %v2783 = vadd.f32 %v2770, %v2782
    %v2784 = vpop.f32.mrf.mxu0
    %2785 = vdwg.mxu0
    %2786 = vmatpush.bf16.msra.mxu0 %v2283
    %2787 = vmatpush.bf16.msra.mxu0 %v2278
    %2788 = vmatpush.bf16.msra.mxu0 %v2273
    %2789 = vmatpush.bf16.msra.mxu0 %v2268
    %2790 = vmatpush.bf16.msra.mxu0 %v2263
    %2791 = vmatpush.bf16.msra.mxu0 %v2258
    %2792 = vmatpush.bf16.msra.mxu0 %v2253
    %2793 = vmatpush.bf16.msra.mxu0 %v2248
    %2794 = vmatmul.bf16.gmra.mxu0 %v1270
    %v2795 = vpop.f32.mrf.mxu0
    %v2796 = vadd.f32 %v2783, %v2795
    %v2797 = vpop.f32.mrf.mxu0
    %2798 = vdwg.mxu0
    %2799 = vmatpush.bf16.msra.mxu0 %v2323
    %2800 = vmatpush.bf16.msra.mxu0 %v2318
    %2801 = vmatpush.bf16.msra.mxu0 %v2313
    %2802 = vmatpush.bf16.msra.mxu0 %v2308
    %2803 = vmatpush.bf16.msra.mxu0 %v2303
    %2804 = vmatpush.bf16.msra.mxu0 %v2298
    %2805 = vmatpush.bf16.msra.mxu0 %v2293
    %2806 = vmatpush.bf16.msra.mxu0 %v2288
    %2807 = vmatmul.bf16.gmra.mxu0 %v1271
    %v2808 = vpop.f32.mrf.mxu0
    %v2809 = vadd.f32 %v2796, %v2808
    %v2810 = vpop.f32.mrf.mxu0
    %2811 = vdwg.mxu0
    %2812 = vmatpush.bf16.msra.mxu0 %v2363
    %2813 = vmatpush.bf16.msra.mxu0 %v2358
    %2814 = vmatpush.bf16.msra.mxu0 %v2353
    %2815 = vmatpush.bf16.msra.mxu0 %v2348
    %2816 = vmatpush.bf16.msra.mxu0 %v2343
    %2817 = vmatpush.bf16.msra.mxu0 %v2338
    %2818 = vmatpush.bf16.msra.mxu0 %v2333
    %2819 = vmatpush.bf16.msra.mxu0 %v2328
    %2820 = vmatmul.bf16.gmra.mxu0 %v1272
    %v2821 = vpop.f32.mrf.mxu0
    %v2822 = vadd.f32 %v2809, %v2821
    %v2823 = vpop.f32.mrf.mxu0
    %2824 = vdwg.mxu0
    %2825 = vmatpush.bf16.msra.mxu0 %v2204
    %2826 = vmatpush.bf16.msra.mxu0 %v2199
    %2827 = vmatpush.bf16.msra.mxu0 %v2194
    %2828 = vmatpush.bf16.msra.mxu0 %v2189
    %2829 = vmatpush.bf16.msra.mxu0 %v2184
    %2830 = vmatpush.bf16.msra.mxu0 %v2179
    %2831 = vmatpush.bf16.msra.mxu0 %v2174
    %2832 = vmatpush.bf16.msra.mxu0 %v2169
    %2833 = vmatmul.bf16.gmra.mxu0 %v1268
    %v2834 = vpop.f32.mrf.mxu0
    %v2835 = vadd.f32 %v1519, %v2834
    %v2836 = vpop.f32.mrf.mxu0
    %2837 = vdwg.mxu0
    %2838 = vmatpush.bf16.msra.mxu0 %v2244
    %2839 = vmatpush.bf16.msra.mxu0 %v2239
    %2840 = vmatpush.bf16.msra.mxu0 %v2234
    %2841 = vmatpush.bf16.msra.mxu0 %v2229
    %2842 = vmatpush.bf16.msra.mxu0 %v2224
    %2843 = vmatpush.bf16.msra.mxu0 %v2219
    %2844 = vmatpush.bf16.msra.mxu0 %v2214
    %2845 = vmatpush.bf16.msra.mxu0 %v2209
    %2846 = vmatmul.bf16.gmra.mxu0 %v1269
    %v2847 = vpop.f32.mrf.mxu0
    %v2848 = vadd.f32 %v2835, %v2847
    %v2849 = vpop.f32.mrf.mxu0
    %2850 = vdwg.mxu0
    %2851 = vmatpush.bf16.msra.mxu0 %v2284
    %2852 = vmatpush.bf16.msra.mxu0 %v2279
    %2853 = vmatpush.bf16.msra.mxu0 %v2274
    %2854 = vmatpush.bf16.msra.mxu0 %v2269
    %2855 = vmatpush.bf16.msra.mxu0 %v2264
    %2856 = vmatpush.bf16.msra.mxu0 %v2259
    %2857 = vmatpush.bf16.msra.mxu0 %v2254
    %2858 = vmatpush.bf16.msra.mxu0 %v2249
    %2859 = vmatmul.bf16.gmra.mxu0 %v1270
    %v2860 = vpop.f32.mrf.mxu0
    %v2861 = vadd.f32 %v2848, %v2860
    %v2862 = vpop.f32.mrf.mxu0
    %2863 = vdwg.mxu0
    %2864 = vmatpush.bf16.msra.mxu0 %v2324
    %2865 = vmatpush.bf16.msra.mxu0 %v2319
    %2866 = vmatpush.bf16.msra.mxu0 %v2314
    %2867 = vmatpush.bf16.msra.mxu0 %v2309
    %2868 = vmatpush.bf16.msra.mxu0 %v2304
    %2869 = vmatpush.bf16.msra.mxu0 %v2299
    %2870 = vmatpush.bf16.msra.mxu0 %v2294
    %2871 = vmatpush.bf16.msra.mxu0 %v2289
    %2872 = vmatmul.bf16.gmra.mxu0 %v1271
    %v2873 = vpop.f32.mrf.mxu0
    %v2874 = vadd.f32 %v2861, %v2873
    %v2875 = vpop.f32.mrf.mxu0
    %2876 = vdwg.mxu0
    %2877 = vmatpush.bf16.msra.mxu0 %v2364
    %2878 = vmatpush.bf16.msra.mxu0 %v2359
    %2879 = vmatpush.bf16.msra.mxu0 %v2354
    %2880 = vmatpush.bf16.msra.mxu0 %v2349
    %2881 = vmatpush.bf16.msra.mxu0 %v2344
    %2882 = vmatpush.bf16.msra.mxu0 %v2339
    %2883 = vmatpush.bf16.msra.mxu0 %v2334
    %2884 = vmatpush.bf16.msra.mxu0 %v2329
    %2885 = vmatmul.bf16.gmra.mxu0 %v1272
    %v2886 = vpop.f32.mrf.mxu0
    %v2887 = vadd.f32 %v2874, %v2886
    %v2888 = vpop.f32.mrf.mxu0
    %2889 = vdwg.mxu0
    %v2890 = vmax.f32 %v2627, 0.0
    %v2891 = vmax.f32 %v2692, 0.0
    %v2892 = vmax.f32 %v2757, 0.0
    %v2893 = vmax.f32 %v2822, 0.0
    %v2894 = vmax.f32 %v2887, 0.0
    %v2895 = vpack.c.bf16 %v2890, %v2890
    %v2896 = vpack.c.bf16 %v2891, %v2891
    %v2897 = vpack.c.bf16 %v2892, %v2892
    %v2898 = vpack.c.bf16 %v2893, %v2893
    %v2899 = vpack.c.bf16 %v2894, %v2894
    %v2900 = vld [vmem:[%s10] sm:$0xf]
    %v2901 = vld [vmem:[%s10 + $0x4] sm:$0xf]
    %v2902 = vld [vmem:[%s10 + $0x8] sm:$0xf]
    %v2903 = vld [vmem:[%s10 + $0xc] sm:$0xf]
    %v2904 = vld [vmem:[%s10 + $0x10] sm:$0xf]
    %v2905 = vld [vmem:[%s10 + $0x14] sm:$0xf]
    %v2906 = vld [vmem:[%s10 + $0x18] sm:$0xf]
    %v2907 = vld [vmem:[%s10 + $0x1c] sm:$0xf]
    %v2908 = vld [vmem:[%s10 + $0x20] sm:$0xf]
    %v2909 = vld [vmem:[%s10 + $0x24] sm:$0xf]
    %v2910 = vld [vmem:[%s10 + $0x28] sm:$0xf]
    %v2911 = vld [vmem:[%s10 + $0x2c] sm:$0xf]
    %v2912 = vld [vmem:[%s10 + $0x30] sm:$0xf]
    %v2913 = vld [vmem:[%s10 + $0x34] sm:$0xf]
    %v2914 = vld [vmem:[%s10 + $0x38] sm:$0xf]
    %v2915 = vld [vmem:[%s10 + $0x3c] sm:$0xf]
    %v2916 = vld [vmem:[%s10 + $0x40] sm:$0xf]
    %v2917 = vld [vmem:[%s10 + $0x44] sm:$0xf]
    %v2918 = vld [vmem:[%s10 + $0x48] sm:$0xf]
    %v2919 = vld [vmem:[%s10 + $0x4c] sm:$0xf]
    %v2920 = vld [vmem:[%s10 + $0x50] sm:$0xf]
    %v2921 = vld [vmem:[%s10 + $0x54] sm:$0xf]
    %v2922 = vld [vmem:[%s10 + $0x58] sm:$0xf]
    %v2923 = vld [vmem:[%s10 + $0x5c] sm:$0xf]
    %v2924 = vld [vmem:[%s10 + $0x60] sm:$0xf]
    %v2925 = vld [vmem:[%s10 + $0x64] sm:$0xf]
    %v2926 = vld [vmem:[%s10 + $0x68] sm:$0xf]
    %v2927 = vld [vmem:[%s10 + $0x6c] sm:$0xf]
    %v2928 = vld [vmem:[%s10 + $0x70] sm:$0xf]
    %v2929 = vld [vmem:[%s10 + $0x74] sm:$0xf]
    %v2930 = vld [vmem:[%s10 + $0x78] sm:$0xf]
    %v2931 = vld [vmem:[%s10 + $0x7c] sm:$0xf]
    %v2932 = vld [vmem:[%s10 + $0x80] sm:$0xf]
    %v2933 = vld [vmem:[%s10 + $0x84] sm:$0xf]
    %v2934 = vld [vmem:[%s10 + $0x88] sm:$0xf]
    %v2935 = vld [vmem:[%s10 + $0x8c] sm:$0xf]
    %v2936 = vld [vmem:[%s10 + $0x90] sm:$0xf]
    %v2937 = vld [vmem:[%s10 + $0x94] sm:$0xf]
    %v2938 = vld [vmem:[%s10 + $0x98] sm:$0xf]
    %v2939 = vld [vmem:[%s10 + $0x9c] sm:$0xf]
    %v2940 = vld [vmem:[%s10 + $0xa0] sm:$0xf]
    %v2941 = vld [vmem:[%s10 + $0xa4] sm:$0xf]
    %v2942 = vld [vmem:[%s10 + $0xa8] sm:$0xf]
    %v2943 = vld [vmem:[%s10 + $0xac] sm:$0xf]
    %v2944 = vld [vmem:[%s10 + $0xb0] sm:$0xf]
    %v2945 = vld [vmem:[%s10 + $0xb4] sm:$0xf]
    %v2946 = vld [vmem:[%s10 + $0xb8] sm:$0xf]
    %v2947 = vld [vmem:[%s10 + $0xbc] sm:$0xf]
    %v2948 = vld [vmem:[%s10 + $0xc0] sm:$0xf]
    %v2949 = vld [vmem:[%s10 + $0xc4] sm:$0xf]
    %v2950 = vld [vmem:[%s10 + $0xc8] sm:$0xf]
    %v2951 = vld [vmem:[%s10 + $0xcc] sm:$0xf]
    %v2952 = vld [vmem:[%s10 + $0xd0] sm:$0xf]
    %v2953 = vld [vmem:[%s10 + $0xd4] sm:$0xf]
    %v2954 = vld [vmem:[%s10 + $0xd8] sm:$0xf]
    %v2955 = vld [vmem:[%s10 + $0xdc] sm:$0xf]
    %v2956 = vld [vmem:[%s10 + $0xe0] sm:$0xf]
    %v2957 = vld [vmem:[%s10 + $0xe4] sm:$0xf]
    %v2958 = vld [vmem:[%s10 + $0xe8] sm:$0xf]
    %v2959 = vld [vmem:[%s10 + $0xec] sm:$0xf]
    %v2960 = vld [vmem:[%s10 + $0xf0] sm:$0xf]
    %v2961 = vld [vmem:[%s10 + $0xf4] sm:$0xf]
    %v2962 = vld [vmem:[%s10 + $0xf8] sm:$0xf]
    %v2963 = vld [vmem:[%s10 + $0xfc] sm:$0xf]
    %v2964 = vld [vmem:[%s10 + $0x100] sm:$0xf]
    %v2965 = vld [vmem:[%s10 + $0x104] sm:$0xf]
    %v2966 = vld [vmem:[%s10 + $0x108] sm:$0xf]
    %v2967 = vld [vmem:[%s10 + $0x10c] sm:$0xf]
    %v2968 = vld [vmem:[%s10 + $0x110] sm:$0xf]
    %v2969 = vld [vmem:[%s10 + $0x114] sm:$0xf]
    %v2970 = vld [vmem:[%s10 + $0x118] sm:$0xf]
    %v2971 = vld [vmem:[%s10 + $0x11c] sm:$0xf]
    %v2972 = vld [vmem:[%s10 + $0x120] sm:$0xf]
    %v2973 = vld [vmem:[%s10 + $0x124] sm:$0xf]
    %v2974 = vld [vmem:[%s10 + $0x128] sm:$0xf]
    %v2975 = vld [vmem:[%s10 + $0x12c] sm:$0xf]
    %v2976 = vld [vmem:[%s10 + $0x130] sm:$0xf]
    %v2977 = vld [vmem:[%s10 + $0x134] sm:$0xf]
    %v2978 = vld [vmem:[%s10 + $0x138] sm:$0xf]
    %v2979 = vld [vmem:[%s10 + $0x13c] sm:$0xf]
    %v2980 = vld [vmem:[%s11] sm:$0x1]
    %v2982 = vperm.slane %v2980, 0
    %v3064 = vunpack.c.l.b16 %v2900
    %v3065 = vunpack.c.l.b16 %v2901
    %v3066 = vunpack.c.l.b16 %v2902
    %v3067 = vunpack.c.l.b16 %v2903
    %v3068 = vunpack.c.l.b16 %v2904
    %v3069 = vunpack.c.l.b16 %v2905
    %v3070 = vunpack.c.l.b16 %v2906
    %v3071 = vunpack.c.l.b16 %v2907
    %v3072 = vunpack.c.l.b16 %v2908
    %v3073 = vunpack.c.l.b16 %v2909
    %v3074 = vunpack.c.l.b16 %v2910
    %v3075 = vunpack.c.l.b16 %v2911
    %v3076 = vunpack.c.l.b16 %v2912
    %v3077 = vunpack.c.l.b16 %v2913
    %v3078 = vunpack.c.l.b16 %v2914
    %v3079 = vunpack.c.l.b16 %v2915
    %v3080 = vunpack.c.l.b16 %v2916
    %v3081 = vunpack.c.l.b16 %v2917
    %v3082 = vunpack.c.l.b16 %v2918
    %v3083 = vunpack.c.l.b16 %v2919
    %v3084 = vunpack.c.l.b16 %v2920
    %v3085 = vunpack.c.l.b16 %v2921
    %v3086 = vunpack.c.l.b16 %v2922
    %v3087 = vunpack.c.l.b16 %v2923
    %v3088 = vunpack.c.l.b16 %v2924
    %v3089 = vunpack.c.l.b16 %v2925
    %v3090 = vunpack.c.l.b16 %v2926
    %v3091 = vunpack.c.l.b16 %v2927
    %v3092 = vunpack.c.l.b16 %v2928
    %v3093 = vunpack.c.l.b16 %v2929
    %v3094 = vunpack.c.l.b16 %v2930
    %v3095 = vunpack.c.l.b16 %v2931
    %v3096 = vunpack.c.l.b16 %v2932
    %v3097 = vunpack.c.l.b16 %v2933
    %v3098 = vunpack.c.l.b16 %v2934
    %v3099 = vunpack.c.l.b16 %v2935
    %v3100 = vunpack.c.l.b16 %v2936
    %v3101 = vunpack.c.l.b16 %v2937
    %v3102 = vunpack.c.l.b16 %v2938
    %v3103 = vunpack.c.l.b16 %v2939
    %v3104 = vunpack.c.l.b16 %v2940
    %v3105 = vunpack.c.l.b16 %v2941
    %v3106 = vunpack.c.l.b16 %v2942
    %v3107 = vunpack.c.l.b16 %v2943
    %v3108 = vunpack.c.l.b16 %v2944
    %v3109 = vunpack.c.l.b16 %v2945
    %v3110 = vunpack.c.l.b16 %v2946
    %v3111 = vunpack.c.l.b16 %v2947
    %v3112 = vunpack.c.l.b16 %v2948
    %v3113 = vunpack.c.l.b16 %v2949
    %v3114 = vunpack.c.l.b16 %v2950
    %v3115 = vunpack.c.l.b16 %v2951
    %v3116 = vunpack.c.l.b16 %v2952
    %v3117 = vunpack.c.l.b16 %v2953
    %v3118 = vunpack.c.l.b16 %v2954
    %v3119 = vunpack.c.l.b16 %v2955
    %v3120 = vunpack.c.l.b16 %v2956
    %v3121 = vunpack.c.l.b16 %v2957
    %v3122 = vunpack.c.l.b16 %v2958
    %v3123 = vunpack.c.l.b16 %v2959
    %v3124 = vunpack.c.l.b16 %v2960
    %v3125 = vunpack.c.l.b16 %v2961
    %v3126 = vunpack.c.l.b16 %v2962
    %v3127 = vunpack.c.l.b16 %v2963
    %v3128 = vunpack.c.l.b16 %v2964
    %v3129 = vunpack.c.l.b16 %v2965
    %v3130 = vunpack.c.l.b16 %v2966
    %v3131 = vunpack.c.l.b16 %v2967
    %v3132 = vunpack.c.l.b16 %v2968
    %v3133 = vunpack.c.l.b16 %v2969
    %v3134 = vunpack.c.l.b16 %v2970
    %v3135 = vunpack.c.l.b16 %v2971
    %v3136 = vunpack.c.l.b16 %v2972
    %v3137 = vunpack.c.l.b16 %v2973
    %v3138 = vunpack.c.l.b16 %v2974
    %v3139 = vunpack.c.l.b16 %v2975
    %v3140 = vunpack.c.l.b16 %v2976
    %v3141 = vunpack.c.l.b16 %v2977
    %v3142 = vunpack.c.l.b16 %v2978
    %v3143 = vunpack.c.l.b16 %v2979
    %v3144 = vpack.c.b16 %v3065, %v3064
    %v3145 = vpack.c.b16 %v3067, %v3066
    %v3146 = vpack.c.b16 %v3069, %v3068
    %v3147 = vpack.c.b16 %v3071, %v3070
    %v3148 = vpack.c.b16 %v3073, %v3072
    %v3149 = vpack.c.b16 %v3075, %v3074
    %v3150 = vpack.c.b16 %v3077, %v3076
    %v3151 = vpack.c.b16 %v3079, %v3078
    %v3152 = vpack.c.b16 %v3081, %v3080
    %v3153 = vpack.c.b16 %v3083, %v3082
    %v3154 = vpack.c.b16 %v3085, %v3084
    %v3155 = vpack.c.b16 %v3087, %v3086
    %v3156 = vpack.c.b16 %v3089, %v3088
    %v3157 = vpack.c.b16 %v3091, %v3090
    %v3158 = vpack.c.b16 %v3093, %v3092
    %v3159 = vpack.c.b16 %v3095, %v3094
    %v3160 = vpack.c.b16 %v3097, %v3096
    %v3161 = vpack.c.b16 %v3099, %v3098
    %v3162 = vpack.c.b16 %v3101, %v3100
    %v3163 = vpack.c.b16 %v3103, %v3102
    %v3164 = vpack.c.b16 %v3105, %v3104
    %v3165 = vpack.c.b16 %v3107, %v3106
    %v3166 = vpack.c.b16 %v3109, %v3108
    %v3167 = vpack.c.b16 %v3111, %v3110
    %v3168 = vpack.c.b16 %v3113, %v3112
    %v3169 = vpack.c.b16 %v3115, %v3114
    %v3170 = vpack.c.b16 %v3117, %v3116
    %v3171 = vpack.c.b16 %v3119, %v3118
    %v3172 = vpack.c.b16 %v3121, %v3120
    %v3173 = vpack.c.b16 %v3123, %v3122
    %v3174 = vpack.c.b16 %v3125, %v3124
    %v3175 = vpack.c.b16 %v3127, %v3126
    %v3176 = vpack.c.b16 %v3129, %v3128
    %v3177 = vpack.c.b16 %v3131, %v3130
    %v3178 = vpack.c.b16 %v3133, %v3132
    %v3179 = vpack.c.b16 %v3135, %v3134
    %v3180 = vpack.c.b16 %v3137, %v3136
    %v3181 = vpack.c.b16 %v3139, %v3138
    %v3182 = vpack.c.b16 %v3141, %v3140
    %v3183 = vpack.c.b16 %v3143, %v3142
    %3224 = vmatpush.bf16.msra.mxu0 %v3151
    %3225 = vmatpush.bf16.msra.mxu0 %v3150
    %3226 = vmatpush.bf16.msra.mxu0 %v3149
    %3227 = vmatpush.bf16.msra.mxu0 %v3148
    %3228 = vmatpush.bf16.msra.mxu0 %v3147
    %3229 = vmatpush.bf16.msra.mxu0 %v3146
    %3230 = vmatpush.bf16.msra.mxu0 %v3145
    %3231 = vmatpush.bf16.msra.mxu0 %v3144
    %3232 = vmatmul.bf16.gmra.mxu0 %v2895
    %v3233 = vpop.f32.mrf.mxu0
    %v3234 = vadd.f32 %v2982, %v3233
    %v3235 = vpop.f32.mrf.mxu0
    %3236 = vdwg.mxu0
    %3237 = vmatpush.bf16.msra.mxu0 %v3159
    %3238 = vmatpush.bf16.msra.mxu0 %v3158
    %3239 = vmatpush.bf16.msra.mxu0 %v3157
    %3240 = vmatpush.bf16.msra.mxu0 %v3156
    %3241 = vmatpush.bf16.msra.mxu0 %v3155
    %3242 = vmatpush.bf16.msra.mxu0 %v3154
    %3243 = vmatpush.bf16.msra.mxu0 %v3153
    %3244 = vmatpush.bf16.msra.mxu0 %v3152
    %3245 = vmatmul.bf16.gmra.mxu0 %v2896
    %v3246 = vpop.f32.mrf.mxu0
    %v3247 = vadd.f32 %v3234, %v3246
    %v3248 = vpop.f32.mrf.mxu0
    %3249 = vdwg.mxu0
    %3250 = vmatpush.bf16.msra.mxu0 %v3167
    %3251 = vmatpush.bf16.msra.mxu0 %v3166
    %3252 = vmatpush.bf16.msra.mxu0 %v3165
    %3253 = vmatpush.bf16.msra.mxu0 %v3164
    %3254 = vmatpush.bf16.msra.mxu0 %v3163
    %3255 = vmatpush.bf16.msra.mxu0 %v3162
    %3256 = vmatpush.bf16.msra.mxu0 %v3161
    %3257 = vmatpush.bf16.msra.mxu0 %v3160
    %3258 = vmatmul.bf16.gmra.mxu0 %v2897
    %v3259 = vpop.f32.mrf.mxu0
    %v3260 = vadd.f32 %v3247, %v3259
    %v3261 = vpop.f32.mrf.mxu0
    %3262 = vdwg.mxu0
    %3263 = vmatpush.bf16.msra.mxu0 %v3175
    %3264 = vmatpush.bf16.msra.mxu0 %v3174
    %3265 = vmatpush.bf16.msra.mxu0 %v3173
    %3266 = vmatpush.bf16.msra.mxu0 %v3172
    %3267 = vmatpush.bf16.msra.mxu0 %v3171
    %3268 = vmatpush.bf16.msra.mxu0 %v3170
    %3269 = vmatpush.bf16.msra.mxu0 %v3169
    %3270 = vmatpush.bf16.msra.mxu0 %v3168
    %3271 = vmatmul.bf16.gmra.mxu0 %v2898
    %v3272 = vpop.f32.mrf.mxu0
    %v3273 = vadd.f32 %v3260, %v3272
    %v3274 = vpop.f32.mrf.mxu0
    %3275 = vdwg.mxu0
    %3276 = vmatpush.bf16.msra.mxu0 %v3183
    %3277 = vmatpush.bf16.msra.mxu0 %v3182
    %3278 = vmatpush.bf16.msra.mxu0 %v3181
    %3279 = vmatpush.bf16.msra.mxu0 %v3180
    %3280 = vmatpush.bf16.msra.mxu0 %v3179
    %3281 = vmatpush.bf16.msra.mxu0 %v3178
    %3282 = vmatpush.bf16.msra.mxu0 %v3177
    %3283 = vmatpush.bf16.msra.mxu0 %v3176
    %3284 = vmatmul.bf16.gmra.mxu0 %v2899
    %v3285 = vpop.f32.mrf.mxu0
    %v3286 = vadd.f32 %v3273, %v3285
    %v3287 = vpop.f32.mrf.mxu0
    %3288 = vdwg.mxu0
    %vm3289 = vcmask 23552
    %3290 = vst.msk [vmem:[%s12] sm:$0xff] %vm3289, %v3286
    // Predicated region
    $region58: #{tpu_custom_call.1} parent=1 // pred_check
      _
    $region59: #{tpu_custom_call.1} parent=1 // pred_check_branch
      %3292 = sbr.rel (0) target = $region61
    $region60: #{tpu_custom_call.1} parent=1 // pred_region
      _
    $region61: #{tpu_custom_call.1} parent=1 // pred_fallthru
      _
    // Predicated region
    $region62: #{tpu_custom_call.1} parent=1 // pred_check
      _
    $region63: #{tpu_custom_call.1} parent=1 // pred_check_branch
      %3294 = sbr.rel (0) target = $region65
    $region64: #{tpu_custom_call.1} parent=1 // pred_region
      _
    $region65: #{tpu_custom_call.1} parent=1 // pred_fallthru
      _
    %3295 = vsyncpa [#allocation3], 1
    %3296 = vsyncpa [#allocation5], 1

</llo_original>
